<compile_context>
chip_gen: v5e
topology: v5e:2x2
jax: 0.10.0
libtpu: 0.0.40
codegen_flags: <defaults>
</compile_context>

<pallas_src>
import functools

import jax
import jax.numpy as jnp
from jax.experimental import pallas as pl
from jax.experimental.pallas import tpu as pltpu

BN_EPS = 1e-5      # nn.BatchNorm1d default
NORM_EPS = 1e-12   # F.normalize default
TAU = 0.996

_VMEM = pl.BlockSpec(memory_space=pltpu.MemorySpace.VMEM)
_SMEM = pl.BlockSpec(memory_space=pltpu.MemorySpace.SMEM)
_HI = jax.lax.Precision.HIGHEST


# ---------------------------------------------------------------------------
# Fused kernel: in-kernel EMA + encoder (both views x both branches) +
# predictor + normalize + symmetric cosine loss.
# ---------------------------------------------------------------------------
def byol_fused_kernel(
    # inputs
    x1_ref, x2_ref,                                           # [B, DIN] x2
    wb_o, bb_o, w1_o, b1_o, g1_o, be1_o, w2_o, b2_o,          # online encoder
    wb_t, bb_t, w1_t, b1_t, g1_t, be1_t, w2_t, b2_t,          # target encoder
    wp1, bp1, gp, bep, wp2, bp2,                              # online predictor
    # outputs
    loss_ref,                                                 # [1, 1] SMEM
    wb_n, bb_n, w1_n, b1_n, g1_n, be1_n, w2_n, b2_n,          # EMA'd target (aliased)
    *, compute_dtype):
    B = x1_ref.shape[0]
    P = wp1.shape[0]

    online = [r[...] for r in (wb_o, bb_o, w1_o, b1_o, g1_o, be1_o, w2_o, b2_o)]

    # ---- EMA momentum update of the target encoder (torch.no_grad block).
    # Written straight to the aliased outputs and reused for the target forward.
    target_new = []
    for o, t_ref, n_ref in zip(
            online,
            (wb_t, bb_t, w1_t, b1_t, g1_t, be1_t, w2_t, b2_t),
            (wb_n, bb_n, w1_n, b1_n, g1_n, be1_n, w2_n, b2_n)):
        t_new = TAU * t_ref[...] + (1.0 - TAU) * o
        n_ref[...] = t_new
        target_new.append(t_new)

    def mm(a, w):
        # MXU matmul, operands optionally cast to bf16, f32 accumulation.
        return jnp.dot(a.astype(compute_dtype), w.astype(compute_dtype),
                       preferred_element_type=jnp.float32)

    def bn_relu_per_view(h, gamma, beta):
        # nn.BatchNorm1d training-mode batch stats, computed per augmented
        # view (each view was a separate forward call in PyTorch).
        # Reshape-based: no slice+concat copies.  Two-pass variance.
        n = h.shape[-1]
        hv = h.reshape(2, B, n)
        m = jnp.mean(hv, axis=1, keepdims=True)
        c = hv - m
        v = jnp.mean(c * c, axis=1, keepdims=True)
        hn = (c * jax.lax.rsqrt(v + BN_EPS)).reshape(2 * B, n)
        return jnp.maximum(hn * gamma + beta, 0.0)

    def l2_normalize(v):
        # F.normalize(dim=1): v / max(||v||, eps) == v * rsqrt(max(||v||^2, eps^2))
        ss = jnp.sum(v * v, axis=1, keepdims=True)
        return v * jax.lax.rsqrt(jnp.maximum(ss, NORM_EPS * NORM_EPS))

    def encoder(x, params):
        wb, bb, w1, b1, g1, be1, w2, b2 = params
        feat = mm(x, wb) + bb                              # backbone Linear
        h = bn_relu_per_view(mm(feat, w1) + b1, g1, be1)   # projector layer1
        return mm(h, w2) + b2                              # projector layer2

    # Both augmented views stacked on the M axis (rows 0:B = view1, B:2B = view2).
    x = jnp.concatenate([x1_ref[...], x2_ref[...]], axis=0)

    z_o = encoder(x, online)          # online projections (z1_o ; z2_o)
    z_t = encoder(x, target_new)      # target projections (z1_t ; z2_t)

    # ---- online predictor on both views at once
    hp = bn_relu_per_view(mm(z_o, wp1[...]) + bp1[...], gp[...], bep[...])
    p = mm(hp, wp2[...]) + bp2[...]

    # ---- normalize + symmetric cosine loss (single full reduction)
    p_n = l2_normalize(p).reshape(2, B, P)
    z_n = l2_normalize(z_t).reshape(2, B, P)
    cross = p_n[0] * z_n[1] + p_n[1] * z_n[0]      # p1.z2_t and p2.z1_t terms
    # MSE(p1,z2_t)/2 + MSE(p2,z1_t)/2 = 2 - mean(sim1) - mean(sim2)
    loss_ref[0, 0] = 2.0 - jnp.sum(cross) / B


# ---------------------------------------------------------------------------
# Wrapper: one pallas_call; target params updated in place via aliasing.
# ---------------------------------------------------------------------------
def _byol_forward(online, target, predictor, x1, x2, *, compute_dtype):
    B = x1.shape[0]
    x1f = x1.reshape(B, -1)     # torch.flatten row-major; free reshape
    x2f = x2.reshape(B, -1)

    n_in = 2 + len(online) + len(target) + len(predictor)
    out_shape = (jax.ShapeDtypeStruct((1, 1), jnp.float32),) + tuple(
        jax.ShapeDtypeStruct(t.shape, t.dtype) for t in target)
    # target params (inputs 10..17) are rewritten in place -> outputs 1..8
    aliases = {2 + len(online) + i: 1 + i for i in range(len(target))}

    outs = pl.pallas_call(
        functools.partial(byol_fused_kernel, compute_dtype=compute_dtype),
        out_shape=out_shape,
        in_specs=[_VMEM] * n_in,
        out_specs=(_SMEM,) + (_VMEM,) * len(target),
        input_output_aliases=aliases,
    )(x1f, x2f, *online, *target, *predictor)

    loss = outs[0][0, 0]
    target_new = tuple(outs[1:])
    return loss, target_new


byol_forward = jax.jit(_byol_forward, static_argnames=("compute_dtype",))


# ---------------------------------------------------------------------------
# Pure-JAX reference (faithful per-call structure, HIGHEST-precision matmuls)
# ---------------------------------------------------------------------------
def _ref_encoder(xf, params):
    wb, bb, w1, b1, g, be, w2, b2 = params
    f = jnp.dot(xf, wb, precision=_HI) + bb
    h = jnp.dot(f, w1, precision=_HI) + b1
    m = h.mean(0, keepdims=True)
    v = ((h - m) ** 2).mean(0, keepdims=True)
    h = jnp.maximum((h - m) / jnp.sqrt(v + BN_EPS) * g + be, 0.0)
    return jnp.dot(h, w2, precision=_HI) + b2


def _ref_mlp(x, params):
    w1, b1, g, be, w2, b2 = params
    h = jnp.dot(x, w1, precision=_HI) + b1
    m = h.mean(0, keepdims=True)
    v = ((h - m) ** 2).mean(0, keepdims=True)
    h = jnp.maximum((h - m) / jnp.sqrt(v + BN_EPS) * g + be, 0.0)
    return jnp.dot(h, w2, precision=_HI) + b2


def _ref_loss(p, z):
    pn = p / jnp.maximum(jnp.linalg.norm(p, axis=1, keepdims=True), NORM_EPS)
    zn = z / jnp.maximum(jnp.linalg.norm(z, axis=1, keepdims=True), NORM_EPS)
    return 2.0 - 2.0 * jnp.sum(pn * zn, axis=-1).mean()


def _ref_forward(online, target, predictor, x1, x2):
    B = x1.shape[0]
    x1f, x2f = x1.reshape(B, -1), x2.reshape(B, -1)
    z1_o, z2_o = _ref_encoder(x1f, online), _ref_encoder(x2f, online)
    p1_o, p2_o = _ref_mlp(z1_o, predictor), _ref_mlp(z2_o, predictor)
    tgt = jax.tree_util.tree_map(lambda t, o: TAU * t + (1 - TAU) * o,
                                 target, online)
    z1_t, z2_t = _ref_encoder(x1f, tgt), _ref_encoder(x2f, tgt)
    loss = 0.5 * _ref_loss(p1_o, z2_t) + 0.5 * _ref_loss(p2_o, z1_t)
    return loss, tgt


# ---------------------------------------------------------------------------
if __name__ == "__main__":
    # small, TPU-friendly shapes
    B, C, H, W = 8, 4, 8, 8
    DIN = C * H * W            # 256
    FEATURE_SIZE = 64          # backbone output (feature_size)
    HIDDEN = 64                # MLP hidden_dim
    PROJ = 32                  # projection_dim

    key = jax.random.PRNGKey(0)
    ks = jax.random.split(key, 8)

    def lin(k, i, o, scale=0.05):
        return jax.random.normal(k, (i, o), jnp.float32) * scale

    # online encoder = synthetic backbone (Linear on flattened input) + projector MLP
    online = (
        lin(ks[0], DIN, FEATURE_SIZE), jnp.zeros((1, FEATURE_SIZE), jnp.float32),
        lin(ks[1], FEATURE_SIZE, HIDDEN), jnp.zeros((1, HIDDEN), jnp.float32),
        jnp.ones((1, HIDDEN), jnp.float32), jnp.zeros((1, HIDDEN), jnp.float32),
        lin(ks[2], HIDDEN, PROJ), jnp.zeros((1, PROJ), jnp.float32),
    )
    # target encoder: deepcopy of online (same values, separate buffers)
    target = jax.tree_util.tree_map(lambda a: a.copy(), online)
    # online predictor MLP
    predictor = (
        lin(ks[3], PROJ, HIDDEN), jnp.zeros((1, HIDDEN), jnp.float32),
        jnp.ones((1, HIDDEN), jnp.float32), jnp.zeros((1, HIDDEN), jnp.float32),
        lin(ks[4], HIDDEN, PROJ), jnp.zeros((1, PROJ), jnp.float32),
    )

    x1 = jax.random.normal(ks[5], (B, C, H, W), jnp.float32)
    x2 = jax.random.normal(ks[6], (B, C, H, W), jnp.float32)

    ref_loss, ref_target = _ref_forward(online, target, predictor, x1, x2)

    # f32 operands: exact structural check against the HIGHEST-precision reference.
    loss32, tgt32 = byol_forward(online, target, predictor, x1, x2,
                                 compute_dtype=jnp.float32)
    loss32 = jax.block_until_ready(loss32)
    assert jnp.isfinite(loss32), "f32 loss is not finite"
    assert abs(float(loss32) - float(ref_loss)) < 1e-3, (float(loss32), float(ref_loss))
    for a, b in zip(tgt32, ref_target):
        assert jnp.allclose(a, b, atol=1e-6), "EMA target update mismatch (f32)"

    # bf16 operands (f32 accumulation): MXU-dense path; loosened tolerance
    # per review correctness note.
    loss16, tgt16 = byol_forward(online, target, predictor, x1, x2,
                                 compute_dtype=jnp.bfloat16)
    loss16 = jax.block_until_ready(loss16)
    assert jnp.isfinite(loss16), "bf16 loss is not finite"
    assert abs(float(loss16) - float(ref_loss)) < 5e-2, (float(loss16), float(ref_loss))
    for a, b in zip(tgt16, ref_target):
        assert jnp.allclose(a, b, atol=1e-6), "EMA target update mismatch (bf16)"

    print("KERNEL_OK")
</pallas_src>

<mosaic_0001>
module attributes {stable_mosaic.version = 11 : i64} {
  func.func @byol_fused_kernel(%arg0: memref<8x256xf32, #tpu.memory_space<vmem>>, %arg1: memref<8x256xf32, #tpu.memory_space<vmem>>, %arg2: memref<256x64xf32, #tpu.memory_space<vmem>>, %arg3: memref<1x64xf32, #tpu.memory_space<vmem>>, %arg4: memref<64x64xf32, #tpu.memory_space<vmem>>, %arg5: memref<1x64xf32, #tpu.memory_space<vmem>>, %arg6: memref<1x64xf32, #tpu.memory_space<vmem>>, %arg7: memref<1x64xf32, #tpu.memory_space<vmem>>, %arg8: memref<64x32xf32, #tpu.memory_space<vmem>>, %arg9: memref<1x32xf32, #tpu.memory_space<vmem>>, %arg10: memref<256x64xf32, #tpu.memory_space<vmem>>, %arg11: memref<1x64xf32, #tpu.memory_space<vmem>>, %arg12: memref<64x64xf32, #tpu.memory_space<vmem>>, %arg13: memref<1x64xf32, #tpu.memory_space<vmem>>, %arg14: memref<1x64xf32, #tpu.memory_space<vmem>>, %arg15: memref<1x64xf32, #tpu.memory_space<vmem>>, %arg16: memref<64x32xf32, #tpu.memory_space<vmem>>, %arg17: memref<1x32xf32, #tpu.memory_space<vmem>>, %arg18: memref<32x64xf32, #tpu.memory_space<vmem>>, %arg19: memref<1x64xf32, #tpu.memory_space<vmem>>, %arg20: memref<1x64xf32, #tpu.memory_space<vmem>>, %arg21: memref<1x64xf32, #tpu.memory_space<vmem>>, %arg22: memref<64x32xf32, #tpu.memory_space<vmem>>, %arg23: memref<1x32xf32, #tpu.memory_space<vmem>>, %arg24: memref<1x1xf32, #tpu.memory_space<smem>>, %arg25: memref<256x64xf32, #tpu.memory_space<vmem>>, %arg26: memref<1x64xf32, #tpu.memory_space<vmem>>, %arg27: memref<64x64xf32, #tpu.memory_space<vmem>>, %arg28: memref<1x64xf32, #tpu.memory_space<vmem>>, %arg29: memref<1x64xf32, #tpu.memory_space<vmem>>, %arg30: memref<1x64xf32, #tpu.memory_space<vmem>>, %arg31: memref<64x32xf32, #tpu.memory_space<vmem>>, %arg32: memref<1x32xf32, #tpu.memory_space<vmem>>) attributes {dimension_semantics = [], scalar_prefetch = 0 : i64, scratch_operands = 0 : i64, tpu.core_type = #tpu.core_type<tc>} {
    %c0 = arith.constant 0 : index
    %c0_0 = arith.constant 0 : index
    %0 = vector.load %arg2[%c0, %c0_0] : memref<256x64xf32, #tpu.memory_space<vmem>>, vector<256x64xf32>
    %c0_1 = arith.constant 0 : index
    %c0_2 = arith.constant 0 : index
    %1 = vector.load %arg3[%c0_1, %c0_2] : memref<1x64xf32, #tpu.memory_space<vmem>>, vector<1x64xf32>
    %c0_3 = arith.constant 0 : index
    %c0_4 = arith.constant 0 : index
    %2 = vector.load %arg4[%c0_3, %c0_4] : memref<64x64xf32, #tpu.memory_space<vmem>>, vector<64x64xf32>
    %c0_5 = arith.constant 0 : index
    %c0_6 = arith.constant 0 : index
    %3 = vector.load %arg5[%c0_5, %c0_6] : memref<1x64xf32, #tpu.memory_space<vmem>>, vector<1x64xf32>
    %c0_7 = arith.constant 0 : index
    %c0_8 = arith.constant 0 : index
    %4 = vector.load %arg6[%c0_7, %c0_8] : memref<1x64xf32, #tpu.memory_space<vmem>>, vector<1x64xf32>
    %c0_9 = arith.constant 0 : index
    %c0_10 = arith.constant 0 : index
    %5 = vector.load %arg7[%c0_9, %c0_10] : memref<1x64xf32, #tpu.memory_space<vmem>>, vector<1x64xf32>
    %c0_11 = arith.constant 0 : index
    %c0_12 = arith.constant 0 : index
    %6 = vector.load %arg8[%c0_11, %c0_12] : memref<64x32xf32, #tpu.memory_space<vmem>>, vector<64x32xf32>
    %c0_13 = arith.constant 0 : index
    %c0_14 = arith.constant 0 : index
    %7 = vector.load %arg9[%c0_13, %c0_14] : memref<1x32xf32, #tpu.memory_space<vmem>>, vector<1x32xf32>
    %c0_15 = arith.constant 0 : index
    %c0_16 = arith.constant 0 : index
    %8 = vector.load %arg10[%c0_15, %c0_16] : memref<256x64xf32, #tpu.memory_space<vmem>>, vector<256x64xf32>
    %cst = arith.constant 0.995999991 : f32
    %9 = vector.broadcast %cst : f32 to vector<256x64xf32>
    %10 = arith.mulf %9, %8 : vector<256x64xf32>
    %cst_17 = arith.constant 4.000000e-03 : f32
    %11 = vector.broadcast %cst_17 : f32 to vector<256x64xf32>
    %12 = arith.mulf %11, %0 : vector<256x64xf32>
    %13 = arith.addf %10, %12 : vector<256x64xf32>
    %c0_18 = arith.constant 0 : index
    %c0_19 = arith.constant 0 : index
    %14 = vector.load %arg25[%c0_18, %c0_19] : memref<256x64xf32, #tpu.memory_space<vmem>>, vector<256x64xf32>
    tpu.vector_store %arg25[%c0_18, %c0_19], %13 {strides = array<i32>} : memref<256x64xf32, #tpu.memory_space<vmem>>, vector<256x64xf32>,
    %c0_20 = arith.constant 0 : index
    %c0_21 = arith.constant 0 : index
    %15 = vector.load %arg11[%c0_20, %c0_21] : memref<1x64xf32, #tpu.memory_space<vmem>>, vector<1x64xf32>
    %cst_22 = arith.constant 0.995999991 : f32
    %16 = vector.broadcast %cst_22 : f32 to vector<1x64xf32>
    %17 = arith.mulf %16, %15 : vector<1x64xf32>
    %cst_23 = arith.constant 4.000000e-03 : f32
    %18 = vector.broadcast %cst_23 : f32 to vector<1x64xf32>
    %19 = arith.mulf %18, %1 : vector<1x64xf32>
    %20 = arith.addf %17, %19 : vector<1x64xf32>
    %c0_24 = arith.constant 0 : index
    %c0_25 = arith.constant 0 : index
    %21 = vector.load %arg26[%c0_24, %c0_25] : memref<1x64xf32, #tpu.memory_space<vmem>>, vector<1x64xf32>
    tpu.vector_store %arg26[%c0_24, %c0_25], %20 {strides = array<i32>} : memref<1x64xf32, #tpu.memory_space<vmem>>, vector<1x64xf32>,
    %c0_26 = arith.constant 0 : index
    %c0_27 = arith.constant 0 : index
    %22 = vector.load %arg12[%c0_26, %c0_27] : memref<64x64xf32, #tpu.memory_space<vmem>>, vector<64x64xf32>
    %cst_28 = arith.constant 0.995999991 : f32
    %23 = vector.broadcast %cst_28 : f32 to vector<64x64xf32>
    %24 = arith.mulf %23, %22 : vector<64x64xf32>
    %cst_29 = arith.constant 4.000000e-03 : f32
    %25 = vector.broadcast %cst_29 : f32 to vector<64x64xf32>
    %26 = arith.mulf %25, %2 : vector<64x64xf32>
    %27 = arith.addf %24, %26 : vector<64x64xf32>
    %c0_30 = arith.constant 0 : index
    %c0_31 = arith.constant 0 : index
    %28 = vector.load %arg27[%c0_30, %c0_31] : memref<64x64xf32, #tpu.memory_space<vmem>>, vector<64x64xf32>
    tpu.vector_store %arg27[%c0_30, %c0_31], %27 {strides = array<i32>} : memref<64x64xf32, #tpu.memory_space<vmem>>, vector<64x64xf32>,
    %c0_32 = arith.constant 0 : index
    %c0_33 = arith.constant 0 : index
    %29 = vector.load %arg13[%c0_32, %c0_33] : memref<1x64xf32, #tpu.memory_space<vmem>>, vector<1x64xf32>
    %cst_34 = arith.constant 0.995999991 : f32
    %30 = vector.broadcast %cst_34 : f32 to vector<1x64xf32>
    %31 = arith.mulf %30, %29 : vector<1x64xf32>
    %cst_35 = arith.constant 4.000000e-03 : f32
    %32 = vector.broadcast %cst_35 : f32 to vector<1x64xf32>
    %33 = arith.mulf %32, %3 : vector<1x64xf32>
    %34 = arith.addf %31, %33 : vector<1x64xf32>
    %c0_36 = arith.constant 0 : index
    %c0_37 = arith.constant 0 : index
    %35 = vector.load %arg28[%c0_36, %c0_37] : memref<1x64xf32, #tpu.memory_space<vmem>>, vector<1x64xf32>
    tpu.vector_store %arg28[%c0_36, %c0_37], %34 {strides = array<i32>} : memref<1x64xf32, #tpu.memory_space<vmem>>, vector<1x64xf32>,
    %c0_38 = arith.constant 0 : index
    %c0_39 = arith.constant 0 : index
    %36 = vector.load %arg14[%c0_38, %c0_39] : memref<1x64xf32, #tpu.memory_space<vmem>>, vector<1x64xf32>
    %cst_40 = arith.constant 0.995999991 : f32
    %37 = vector.broadcast %cst_40 : f32 to vector<1x64xf32>
    %38 = arith.mulf %37, %36 : vector<1x64xf32>
    %cst_41 = arith.constant 4.000000e-03 : f32
    %39 = vector.broadcast %cst_41 : f32 to vector<1x64xf32>
    %40 = arith.mulf %39, %4 : vector<1x64xf32>
    %41 = arith.addf %38, %40 : vector<1x64xf32>
    %c0_42 = arith.constant 0 : index
    %c0_43 = arith.constant 0 : index
    %42 = vector.load %arg29[%c0_42, %c0_43] : memref<1x64xf32, #tpu.memory_space<vmem>>, vector<1x64xf32>
    tpu.vector_store %arg29[%c0_42, %c0_43], %41 {strides = array<i32>} : memref<1x64xf32, #tpu.memory_space<vmem>>, vector<1x64xf32>,
    %c0_44 = arith.constant 0 : index
    %c0_45 = arith.constant 0 : index
    %43 = vector.load %arg15[%c0_44, %c0_45] : memref<1x64xf32, #tpu.memory_space<vmem>>, vector<1x64xf32>
    %cst_46 = arith.constant 0.995999991 : f32
    %44 = vector.broadcast %cst_46 : f32 to vector<1x64xf32>
    %45 = arith.mulf %44, %43 : vector<1x64xf32>
    %cst_47 = arith.constant 4.000000e-03 : f32
    %46 = vector.broadcast %cst_47 : f32 to vector<1x64xf32>
    %47 = arith.mulf %46, %5 : vector<1x64xf32>
    %48 = arith.addf %45, %47 : vector<1x64xf32>
    %c0_48 = arith.constant 0 : index
    %c0_49 = arith.constant 0 : index
    %49 = vector.load %arg30[%c0_48, %c0_49] : memref<1x64xf32, #tpu.memory_space<vmem>>, vector<1x64xf32>
    tpu.vector_store %arg30[%c0_48, %c0_49], %48 {strides = array<i32>} : memref<1x64xf32, #tpu.memory_space<vmem>>, vector<1x64xf32>,
    %c0_50 = arith.constant 0 : index
    %c0_51 = arith.constant 0 : index
    %50 = vector.load %arg16[%c0_50, %c0_51] : memref<64x32xf32, #tpu.memory_space<vmem>>, vector<64x32xf32>
    %cst_52 = arith.constant 0.995999991 : f32
    %51 = vector.broadcast %cst_52 : f32 to vector<64x32xf32>
    %52 = arith.mulf %51, %50 : vector<64x32xf32>
    %cst_53 = arith.constant 4.000000e-03 : f32
    %53 = vector.broadcast %cst_53 : f32 to vector<64x32xf32>
    %54 = arith.mulf %53, %6 : vector<64x32xf32>
    %55 = arith.addf %52, %54 : vector<64x32xf32>
    %c0_54 = arith.constant 0 : index
    %c0_55 = arith.constant 0 : index
    %56 = vector.load %arg31[%c0_54, %c0_55] : memref<64x32xf32, #tpu.memory_space<vmem>>, vector<64x32xf32>
    tpu.vector_store %arg31[%c0_54, %c0_55], %55 {strides = array<i32>} : memref<64x32xf32, #tpu.memory_space<vmem>>, vector<64x32xf32>,
    %c0_56 = arith.constant 0 : index
    %c0_57 = arith.constant 0 : index
    %57 = vector.load %arg17[%c0_56, %c0_57] : memref<1x32xf32, #tpu.memory_space<vmem>>, vector<1x32xf32>
    %cst_58 = arith.constant 0.995999991 : f32
    %58 = vector.broadcast %cst_58 : f32 to vector<1x32xf32>
    %59 = arith.mulf %58, %57 : vector<1x32xf32>
    %cst_59 = arith.constant 4.000000e-03 : f32
    %60 = vector.broadcast %cst_59 : f32 to vector<1x32xf32>
    %61 = arith.mulf %60, %7 : vector<1x32xf32>
    %62 = arith.addf %59, %61 : vector<1x32xf32>
    %c0_60 = arith.constant 0 : index
    %c0_61 = arith.constant 0 : index
    %63 = vector.load %arg32[%c0_60, %c0_61] : memref<1x32xf32, #tpu.memory_space<vmem>>, vector<1x32xf32>
    tpu.vector_store %arg32[%c0_60, %c0_61], %62 {strides = array<i32>} : memref<1x32xf32, #tpu.memory_space<vmem>>, vector<1x32xf32>,
    %c0_62 = arith.constant 0 : index
    %c0_63 = arith.constant 0 : index
    %64 = vector.load %arg0[%c0_62, %c0_63] : memref<8x256xf32, #tpu.memory_space<vmem>>, vector<8x256xf32>
    %c0_64 = arith.constant 0 : index
    %c0_65 = arith.constant 0 : index
    %65 = vector.load %arg1[%c0_64, %c0_65] : memref<8x256xf32, #tpu.memory_space<vmem>>, vector<8x256xf32>
    %66 = tpu.concatenate %64, %65 in 0 : vector<8x256xf32>, vector<8x256xf32> -> vector<16x256xf32>
    %cst_66 = arith.constant dense<0.000000e+00> : vector<16x64xf32>
    %67 = tpu.matmul %66, %0, %cst_66 {dimension_numbers = #tpu.dot_dimension_numbers<[1], [0], [0], [1], [0, 0, 1, 1], [], []>} : vector<16x256xf32>, vector<256x64xf32>, vector<16x64xf32> -> vector<16x64xf32>
    %68 = vector.broadcast %1 : vector<1x64xf32> to vector<16x64xf32>
    %69 = arith.addf %67, %68 : vector<16x64xf32>
    %cst_67 = arith.constant dense<0.000000e+00> : vector<16x64xf32>
    %70 = tpu.matmul %69, %2, %cst_67 {dimension_numbers = #tpu.dot_dimension_numbers<[1], [0], [0], [1], [0, 0, 1, 1], [], []>} : vector<16x64xf32>, vector<64x64xf32>, vector<16x64xf32> -> vector<16x64xf32>
    %71 = vector.broadcast %3 : vector<1x64xf32> to vector<16x64xf32>
    %72 = arith.addf %70, %71 : vector<16x64xf32>
    %73 = vector.shape_cast %72 : vector<16x64xf32> to vector<2x8x64xf32>
    %cst_68 = arith.constant dense<0.000000e+00> : vector<2x64xf32>
    %74 = vector.multi_reduction <add>, %73, %cst_68 [1] : vector<2x8x64xf32> to vector<2x64xf32>
    %75 = vector.shape_cast %74 : vector<2x64xf32> to vector<2x1x64xf32>
    %cst_69 = arith.constant 8.000000e+00 : f32
    %76 = vector.broadcast %cst_69 : f32 to vector<2x1x64xf32>
    %77 = arith.divf %75, %76 : vector<2x1x64xf32>
    %78 = vector.broadcast %77 : vector<2x1x64xf32> to vector<2x8x64xf32>
    %79 = arith.subf %73, %78 : vector<2x8x64xf32>
    %80 = arith.mulf %79, %79 : vector<2x8x64xf32>
    %cst_70 = arith.constant dense<0.000000e+00> : vector<2x64xf32>
    %81 = vector.multi_reduction <add>, %80, %cst_70 [1] : vector<2x8x64xf32> to vector<2x64xf32>
    %82 = vector.shape_cast %81 : vector<2x64xf32> to vector<2x1x64xf32>
    %cst_71 = arith.constant 8.000000e+00 : f32
    %83 = vector.broadcast %cst_71 : f32 to vector<2x1x64xf32>
    %84 = arith.divf %82, %83 : vector<2x1x64xf32>
    %cst_72 = arith.constant 9.99999974E-6 : f32
    %85 = vector.broadcast %cst_72 : f32 to vector<2x1x64xf32>
    %86 = arith.addf %84, %85 : vector<2x1x64xf32>
    %87 = math.rsqrt %86 : vector<2x1x64xf32>
    %88 = vector.broadcast %87 : vector<2x1x64xf32> to vector<2x8x64xf32>
    %89 = arith.mulf %79, %88 : vector<2x8x64xf32>
    %90 = vector.shape_cast %89 : vector<2x8x64xf32> to vector<16x64xf32>
    %91 = vector.broadcast %4 : vector<1x64xf32> to vector<16x64xf32>
    %92 = arith.mulf %90, %91 : vector<16x64xf32>
    %93 = vector.broadcast %5 : vector<1x64xf32> to vector<16x64xf32>
    %94 = arith.addf %92, %93 : vector<16x64xf32>
    %cst_73 = arith.constant 0.000000e+00 : f32
    %95 = vector.broadcast %cst_73 : f32 to vector<16x64xf32>
    %96 = arith.maximumf %94, %95 : vector<16x64xf32>
    %cst_74 = arith.constant dense<0.000000e+00> : vector<16x32xf32>
    %97 = tpu.matmul %96, %6, %cst_74 {dimension_numbers = #tpu.dot_dimension_numbers<[1], [0], [0], [1], [0, 0, 1, 1], [], []>} : vector<16x64xf32>, vector<64x32xf32>, vector<16x32xf32> -> vector<16x32xf32>
    %98 = vector.broadcast %7 : vector<1x32xf32> to vector<16x32xf32>
    %99 = arith.addf %97, %98 : vector<16x32xf32>
    %cst_75 = arith.constant dense<0.000000e+00> : vector<16x64xf32>
    %100 = tpu.matmul %66, %13, %cst_75 {dimension_numbers = #tpu.dot_dimension_numbers<[1], [0], [0], [1], [0, 0, 1, 1], [], []>} : vector<16x256xf32>, vector<256x64xf32>, vector<16x64xf32> -> vector<16x64xf32>
    %101 = vector.broadcast %20 : vector<1x64xf32> to vector<16x64xf32>
    %102 = arith.addf %100, %101 : vector<16x64xf32>
    %cst_76 = arith.constant dense<0.000000e+00> : vector<16x64xf32>
    %103 = tpu.matmul %102, %27, %cst_76 {dimension_numbers = #tpu.dot_dimension_numbers<[1], [0], [0], [1], [0, 0, 1, 1], [], []>} : vector<16x64xf32>, vector<64x64xf32>, vector<16x64xf32> -> vector<16x64xf32>
    %104 = vector.broadcast %34 : vector<1x64xf32> to vector<16x64xf32>
    %105 = arith.addf %103, %104 : vector<16x64xf32>
    %106 = vector.shape_cast %105 : vector<16x64xf32> to vector<2x8x64xf32>
    %cst_77 = arith.constant dense<0.000000e+00> : vector<2x64xf32>
    %107 = vector.multi_reduction <add>, %106, %cst_77 [1] : vector<2x8x64xf32> to vector<2x64xf32>
    %108 = vector.shape_cast %107 : vector<2x64xf32> to vector<2x1x64xf32>
    %cst_78 = arith.constant 8.000000e+00 : f32
    %109 = vector.broadcast %cst_78 : f32 to vector<2x1x64xf32>
    %110 = arith.divf %108, %109 : vector<2x1x64xf32>
    %111 = vector.broadcast %110 : vector<2x1x64xf32> to vector<2x8x64xf32>
    %112 = arith.subf %106, %111 : vector<2x8x64xf32>
    %113 = arith.mulf %112, %112 : vector<2x8x64xf32>
    %cst_79 = arith.constant dense<0.000000e+00> : vector<2x64xf32>
    %114 = vector.multi_reduction <add>, %113, %cst_79 [1] : vector<2x8x64xf32> to vector<2x64xf32>
    %115 = vector.shape_cast %114 : vector<2x64xf32> to vector<2x1x64xf32>
    %cst_80 = arith.constant 8.000000e+00 : f32
    %116 = vector.broadcast %cst_80 : f32 to vector<2x1x64xf32>
    %117 = arith.divf %115, %116 : vector<2x1x64xf32>
    %cst_81 = arith.constant 9.99999974E-6 : f32
    %118 = vector.broadcast %cst_81 : f32 to vector<2x1x64xf32>
    %119 = arith.addf %117, %118 : vector<2x1x64xf32>
    %120 = math.rsqrt %119 : vector<2x1x64xf32>
    %121 = vector.broadcast %120 : vector<2x1x64xf32> to vector<2x8x64xf32>
    %122 = arith.mulf %112, %121 : vector<2x8x64xf32>
    %123 = vector.shape_cast %122 : vector<2x8x64xf32> to vector<16x64xf32>
    %124 = vector.broadcast %41 : vector<1x64xf32> to vector<16x64xf32>
    %125 = arith.mulf %123, %124 : vector<16x64xf32>
    %126 = vector.broadcast %48 : vector<1x64xf32> to vector<16x64xf32>
    %127 = arith.addf %125, %126 : vector<16x64xf32>
    %cst_82 = arith.constant 0.000000e+00 : f32
    %128 = vector.broadcast %cst_82 : f32 to vector<16x64xf32>
    %129 = arith.maximumf %127, %128 : vector<16x64xf32>
    %cst_83 = arith.constant dense<0.000000e+00> : vector<16x32xf32>
    %130 = tpu.matmul %129, %55, %cst_83 {dimension_numbers = #tpu.dot_dimension_numbers<[1], [0], [0], [1], [0, 0, 1, 1], [], []>} : vector<16x64xf32>, vector<64x32xf32>, vector<16x32xf32> -> vector<16x32xf32>
    %131 = vector.broadcast %62 : vector<1x32xf32> to vector<16x32xf32>
    %132 = arith.addf %130, %131 : vector<16x32xf32>
    %c0_84 = arith.constant 0 : index
    %c0_85 = arith.constant 0 : index
    %133 = vector.load %arg18[%c0_84, %c0_85] : memref<32x64xf32, #tpu.memory_space<vmem>>, vector<32x64xf32>
    %cst_86 = arith.constant dense<0.000000e+00> : vector<16x64xf32>
    %134 = tpu.matmul %99, %133, %cst_86 {dimension_numbers = #tpu.dot_dimension_numbers<[1], [0], [0], [1], [0, 0, 1, 1], [], []>} : vector<16x32xf32>, vector<32x64xf32>, vector<16x64xf32> -> vector<16x64xf32>
    %c0_87 = arith.constant 0 : index
    %c0_88 = arith.constant 0 : index
    %135 = vector.load %arg19[%c0_87, %c0_88] : memref<1x64xf32, #tpu.memory_space<vmem>>, vector<1x64xf32>
    %136 = vector.broadcast %135 : vector<1x64xf32> to vector<16x64xf32>
    %137 = arith.addf %134, %136 : vector<16x64xf32>
    %c0_89 = arith.constant 0 : index
    %c0_90 = arith.constant 0 : index
    %138 = vector.load %arg20[%c0_89, %c0_90] : memref<1x64xf32, #tpu.memory_space<vmem>>, vector<1x64xf32>
    %c0_91 = arith.constant 0 : index
    %c0_92 = arith.constant 0 : index
    %139 = vector.load %arg21[%c0_91, %c0_92] : memref<1x64xf32, #tpu.memory_space<vmem>>, vector<1x64xf32>
    %140 = vector.shape_cast %137 : vector<16x64xf32> to vector<2x8x64xf32>
    %cst_93 = arith.constant dense<0.000000e+00> : vector<2x64xf32>
    %141 = vector.multi_reduction <add>, %140, %cst_93 [1] : vector<2x8x64xf32> to vector<2x64xf32>
    %142 = vector.shape_cast %141 : vector<2x64xf32> to vector<2x1x64xf32>
    %cst_94 = arith.constant 8.000000e+00 : f32
    %143 = vector.broadcast %cst_94 : f32 to vector<2x1x64xf32>
    %144 = arith.divf %142, %143 : vector<2x1x64xf32>
    %145 = vector.broadcast %144 : vector<2x1x64xf32> to vector<2x8x64xf32>
    %146 = arith.subf %140, %145 : vector<2x8x64xf32>
    %147 = arith.mulf %146, %146 : vector<2x8x64xf32>
    %cst_95 = arith.constant dense<0.000000e+00> : vector<2x64xf32>
    %148 = vector.multi_reduction <add>, %147, %cst_95 [1] : vector<2x8x64xf32> to vector<2x64xf32>
    %149 = vector.shape_cast %148 : vector<2x64xf32> to vector<2x1x64xf32>
    %cst_96 = arith.constant 8.000000e+00 : f32
    %150 = vector.broadcast %cst_96 : f32 to vector<2x1x64xf32>
    %151 = arith.divf %149, %150 : vector<2x1x64xf32>
    %cst_97 = arith.constant 9.99999974E-6 : f32
    %152 = vector.broadcast %cst_97 : f32 to vector<2x1x64xf32>
    %153 = arith.addf %151, %152 : vector<2x1x64xf32>
    %154 = math.rsqrt %153 : vector<2x1x64xf32>
    %155 = vector.broadcast %154 : vector<2x1x64xf32> to vector<2x8x64xf32>
    %156 = arith.mulf %146, %155 : vector<2x8x64xf32>
    %157 = vector.shape_cast %156 : vector<2x8x64xf32> to vector<16x64xf32>
    %158 = vector.broadcast %138 : vector<1x64xf32> to vector<16x64xf32>
    %159 = arith.mulf %157, %158 : vector<16x64xf32>
    %160 = vector.broadcast %139 : vector<1x64xf32> to vector<16x64xf32>
    %161 = arith.addf %159, %160 : vector<16x64xf32>
    %cst_98 = arith.constant 0.000000e+00 : f32
    %162 = vector.broadcast %cst_98 : f32 to vector<16x64xf32>
    %163 = arith.maximumf %161, %162 : vector<16x64xf32>
    %c0_99 = arith.constant 0 : index
    %c0_100 = arith.constant 0 : index
    %164 = vector.load %arg22[%c0_99, %c0_100] : memref<64x32xf32, #tpu.memory_space<vmem>>, vector<64x32xf32>
    %cst_101 = arith.constant dense<0.000000e+00> : vector<16x32xf32>
    %165 = tpu.matmul %163, %164, %cst_101 {dimension_numbers = #tpu.dot_dimension_numbers<[1], [0], [0], [1], [0, 0, 1, 1], [], []>} : vector<16x64xf32>, vector<64x32xf32>, vector<16x32xf32> -> vector<16x32xf32>
    %c0_102 = arith.constant 0 : index
    %c0_103 = arith.constant 0 : index
    %166 = vector.load %arg23[%c0_102, %c0_103] : memref<1x32xf32, #tpu.memory_space<vmem>>, vector<1x32xf32>
    %167 = vector.broadcast %166 : vector<1x32xf32> to vector<16x32xf32>
    %168 = arith.addf %165, %167 : vector<16x32xf32>
    %169 = arith.mulf %168, %168 : vector<16x32xf32>
    %cst_104 = arith.constant dense<0.000000e+00> : vector<16xf32>
    %170 = vector.multi_reduction <add>, %169, %cst_104 [1] : vector<16x32xf32> to vector<16xf32>
    %171 = vector.shape_cast %170 : vector<16xf32> to vector<16x1xf32>
    %cst_105 = arith.constant 1.000000e-24 : f32
    %172 = vector.broadcast %cst_105 : f32 to vector<16x1xf32>
    %173 = arith.maximumf %171, %172 : vector<16x1xf32>
    %174 = math.rsqrt %173 : vector<16x1xf32>
    %175 = vector.broadcast %174 : vector<16x1xf32> to vector<16x32xf32>
    %176 = arith.mulf %168, %175 : vector<16x32xf32>
    %177 = vector.shape_cast %176 : vector<16x32xf32> to vector<2x8x32xf32>
    %178 = arith.mulf %132, %132 : vector<16x32xf32>
    %cst_106 = arith.constant dense<0.000000e+00> : vector<16xf32>
    %179 = vector.multi_reduction <add>, %178, %cst_106 [1] : vector<16x32xf32> to vector<16xf32>
    %180 = vector.shape_cast %179 : vector<16xf32> to vector<16x1xf32>
    %cst_107 = arith.constant 1.000000e-24 : f32
    %181 = vector.broadcast %cst_107 : f32 to vector<16x1xf32>
    %182 = arith.maximumf %180, %181 : vector<16x1xf32>
    %183 = math.rsqrt %182 : vector<16x1xf32>
    %184 = vector.broadcast %183 : vector<16x1xf32> to vector<16x32xf32>
    %185 = arith.mulf %132, %184 : vector<16x32xf32>
    %186 = vector.shape_cast %185 : vector<16x32xf32> to vector<2x8x32xf32>
    %187 = vector.extract_strided_slice %177 {offsets = [0, 0, 0], sizes = [1, 8, 32], strides = [1, 1, 1]} : vector<2x8x32xf32> to vector<1x8x32xf32>
    %188 = vector.shape_cast %187 : vector<1x8x32xf32> to vector<8x32xf32>
    %189 = vector.extract_strided_slice %186 {offsets = [1, 0, 0], sizes = [1, 8, 32], strides = [1, 1, 1]} : vector<2x8x32xf32> to vector<1x8x32xf32>
    %190 = vector.shape_cast %189 : vector<1x8x32xf32> to vector<8x32xf32>
    %191 = arith.mulf %188, %190 : vector<8x32xf32>
    %192 = vector.extract_strided_slice %177 {offsets = [1, 0, 0], sizes = [1, 8, 32], strides = [1, 1, 1]} : vector<2x8x32xf32> to vector<1x8x32xf32>
    %193 = vector.shape_cast %192 : vector<1x8x32xf32> to vector<8x32xf32>
    %194 = vector.extract_strided_slice %186 {offsets = [0, 0, 0], sizes = [1, 8, 32], strides = [1, 1, 1]} : vector<2x8x32xf32> to vector<1x8x32xf32>
    %195 = vector.shape_cast %194 : vector<1x8x32xf32> to vector<8x32xf32>
    %196 = arith.mulf %193, %195 : vector<8x32xf32>
    %197 = arith.addf %191, %196 : vector<8x32xf32>
    %198 = vector.shape_cast %197 : vector<8x32xf32> to vector<1x8x32xf32>
    %cst_108 = arith.constant dense<0.000000e+00> : vector<1xf32>
    %199 = vector.multi_reduction <add>, %198, %cst_108 [1, 2] : vector<1x8x32xf32> to vector<1xf32>
    %200 = vector.shape_cast %199 : vector<1xf32> to vector<1x1x1xf32>
    %201 = vector.extract %200[0, 0, 0] : f32 from vector<1x1x1xf32>
    %cst_109 = arith.constant 8.000000e+00 : f32
    %202 = arith.divf %201, %cst_109 : f32
    %cst_110 = arith.constant 2.000000e+00 : f32
    %203 = arith.subf %cst_110, %202 : f32
    %c0_111 = arith.constant 0 : index
    %c0_112 = arith.constant 0 : index
    %204 = memref.load %arg24[%c0_111, %c0_112] : memref<1x1xf32, #tpu.memory_space<smem>>
    memref.store %203, %arg24[%c0_111, %c0_112] : memref<1x1xf32, #tpu.memory_space<smem>>
    return
  }
}

</mosaic_0001>

<llo_original>
// kernel: _byol_forward.1
$region0: #{_byol_forward.1}
  #allocation0 [shape = 'u32[]', space=smem, size = 0x4, offset = 0x4, fixed_abs, tag = 'smem constant byte address 0x4 - core index']
  #allocation1 [shape = 'u32[72,128]{1,0:T(1,128)}', space=vmem, size = 0x9000, scoped, tag = 'internal scratch']
  %s0 = inlined_call_operand.smem [shape: u32[33], index: -1, kind: input, shape index: {}]
  %s1 = sld [smem:[%s0]]
  %s2 = scalar_lea.smem %s0, 1
  %s3 = sld [smem:[%s2]]
  %s4 = scalar_lea.smem %s0, 2
  %s5 = sld [smem:[%s4]]
  %s6 = scalar_lea.smem %s0, 3
  %s7 = sld [smem:[%s6]]
  %s8 = scalar_lea.smem %s0, 4
  %s9 = sld [smem:[%s8]]
  %s10 = scalar_lea.smem %s0, 5
  %s11 = sld [smem:[%s10]]
  %s12 = scalar_lea.smem %s0, 6
  %s13 = sld [smem:[%s12]]
  %s14 = scalar_lea.smem %s0, 7
  %s15 = sld [smem:[%s14]]
  %s16 = scalar_lea.smem %s0, 8
  %s17 = sld [smem:[%s16]]
  %s18 = scalar_lea.smem %s0, 9
  %s19 = sld [smem:[%s18]]
  %s20 = scalar_lea.smem %s0, 10
  %s21 = sld [smem:[%s20]]
  %s22 = scalar_lea.smem %s0, 11
  %s23 = sld [smem:[%s22]]
  %s24 = scalar_lea.smem %s0, 12
  %s25 = sld [smem:[%s24]]
  %s26 = scalar_lea.smem %s0, 13
  %s27 = sld [smem:[%s26]]
  %s28 = scalar_lea.smem %s0, 14
  %s29 = sld [smem:[%s28]]
  %s30 = scalar_lea.smem %s0, 15
  %s31 = sld [smem:[%s30]]
  %s32 = scalar_lea.smem %s0, 16
  %s33 = sld [smem:[%s32]]
  %s34 = scalar_lea.smem %s0, 17
  %s35 = sld [smem:[%s34]]
  %s36 = scalar_lea.smem %s0, 18
  %s37 = sld [smem:[%s36]]
  %s38 = scalar_lea.smem %s0, 19
  %s39 = sld [smem:[%s38]]
  %s40 = scalar_lea.smem %s0, 20
  %s41 = sld [smem:[%s40]]
  %s42 = scalar_lea.smem %s0, 21
  %s43 = sld [smem:[%s42]]
  %s44 = scalar_lea.smem %s0, 22
  %s45 = sld [smem:[%s44]]
  %s46 = scalar_lea.smem %s0, 23
  %s47 = sld [smem:[%s46]]
  %s48 = scalar_lea.smem %s0, 24
  %s49 = sld [smem:[%s48]]
  %s50 = scalar_lea.smem %s0, 25
  %s51 = sld [smem:[%s50]]
  %s52 = scalar_lea.smem %s0, 26
  %s53 = sld [smem:[%s52]]
  %s54 = scalar_lea.smem %s0, 27
  %s55 = sld [smem:[%s54]]
  %s56 = scalar_lea.smem %s0, 28
  %s57 = sld [smem:[%s56]]
  %s58 = scalar_lea.smem %s0, 29
  %s59 = sld [smem:[%s58]]
  %s60 = scalar_lea.smem %s0, 30
  %s61 = sld [smem:[%s60]]
  %s62 = scalar_lea.smem %s0, 31
  %s63 = sld [smem:[%s62]]
  %s64 = scalar_lea.smem %s0, 32
  %s65 = sld [smem:[%s64]]
  %66 = xla_tuple %s49, %s51, %s53, %s55, %s57, %s59, %s61, %s63, %s65
  %s67 = sld [smem:[#allocation0]]
  $region170: #{_byol_forward.1} parent=0
    _
  %s69 = ssub.s32 1, %s67
  %s70 = scalar_select 0, %s69, %s67
  $region1: #{_byol_forward.1} parent=0
    #allocation2 [shape = 'u8[512]{0}', space=smem, size = 0x200, scoped, tag = 'output window, operand 0, single buffered']
    #allocation3 [shape = 's32[1]{0}', space=sflag, size = 0x4, scoped, tag = 'scoped memory for _byol_forward.1']
    %71 = vsyncpa [#allocation3], 0
    // Predicated region
    $region2: #{_byol_forward.1} parent=1 // pred_check
      _
    $region3: #{_byol_forward.1} parent=1 // pred_check_branch
      %73 = sbr.rel (0) target = $region5
    $region4: #{_byol_forward.1} parent=1 // pred_region
      _
    $region5: #{_byol_forward.1} parent=1 // pred_fallthru
      _
    // Predicated region
    $region6: #{_byol_forward.1} parent=1 // pred_check
      _
    $region7: #{_byol_forward.1} parent=1 // pred_check_branch
      %75 = sbr.rel (0) target = $region9
    $region8: #{_byol_forward.1} parent=1 // pred_region
      _
    $region9: #{_byol_forward.1} parent=1 // pred_fallthru
      _
    // Predicated region
    $region10: #{_byol_forward.1} parent=1 // pred_check
      _
    $region11: #{_byol_forward.1} parent=1 // pred_check_branch
      %77 = sbr.rel (0) target = $region13
    $region12: #{_byol_forward.1} parent=1 // pred_region
      _
    $region13: #{_byol_forward.1} parent=1 // pred_fallthru
      _
    // Predicated region
    $region14: #{_byol_forward.1} parent=1 // pred_check
      _
    $region15: #{_byol_forward.1} parent=1 // pred_check_branch
      %79 = sbr.rel (0) target = $region17
    $region16: #{_byol_forward.1} parent=1 // pred_region
      _
    $region17: #{_byol_forward.1} parent=1 // pred_fallthru
      _
    // Predicated region
    $region18: #{_byol_forward.1} parent=1 // pred_check
      _
    $region19: #{_byol_forward.1} parent=1 // pred_check_branch
      %81 = sbr.rel (0) target = $region21
    $region20: #{_byol_forward.1} parent=1 // pred_region
      _
    $region21: #{_byol_forward.1} parent=1 // pred_fallthru
      _
    // Predicated region
    $region22: #{_byol_forward.1} parent=1 // pred_check
      _
    $region23: #{_byol_forward.1} parent=1 // pred_check_branch
      %83 = sbr.rel (0) target = $region25
    $region24: #{_byol_forward.1} parent=1 // pred_region
      _
    $region25: #{_byol_forward.1} parent=1 // pred_fallthru
      _
    // Predicated region
    $region26: #{_byol_forward.1} parent=1 // pred_check
      _
    $region27: #{_byol_forward.1} parent=1 // pred_check_branch
      %85 = sbr.rel (0) target = $region29
    $region28: #{_byol_forward.1} parent=1 // pred_region
      _
    $region29: #{_byol_forward.1} parent=1 // pred_fallthru
      _
    // Predicated region
    $region30: #{_byol_forward.1} parent=1 // pred_check
      _
    $region31: #{_byol_forward.1} parent=1 // pred_check_branch
      %87 = sbr.rel (0) target = $region33
    $region32: #{_byol_forward.1} parent=1 // pred_region
      _
    $region33: #{_byol_forward.1} parent=1 // pred_fallthru
      _
    // Predicated region
    $region34: #{_byol_forward.1} parent=1 // pred_check
      _
    $region35: #{_byol_forward.1} parent=1 // pred_check_branch
      %89 = sbr.rel (0) target = $region37
    $region36: #{_byol_forward.1} parent=1 // pred_region
      _
    $region37: #{_byol_forward.1} parent=1 // pred_fallthru
      _
    // Predicated region
    $region38: #{_byol_forward.1} parent=1 // pred_check
      _
    $region39: #{_byol_forward.1} parent=1 // pred_check_branch
      %91 = sbr.rel (0) target = $region41
    $region40: #{_byol_forward.1} parent=1 // pred_region
      _
    $region41: #{_byol_forward.1} parent=1 // pred_fallthru
      _
    // Predicated region
    $region42: #{_byol_forward.1} parent=1 // pred_check
      _
    $region43: #{_byol_forward.1} parent=1 // pred_check_branch
      %93 = sbr.rel (0) target = $region45
    $region44: #{_byol_forward.1} parent=1 // pred_region
      _
    $region45: #{_byol_forward.1} parent=1 // pred_fallthru
      _
    // Predicated region
    $region46: #{_byol_forward.1} parent=1 // pred_check
      _
    $region47: #{_byol_forward.1} parent=1 // pred_check_branch
      %95 = sbr.rel (0) target = $region49
    $region48: #{_byol_forward.1} parent=1 // pred_region
      _
    $region49: #{_byol_forward.1} parent=1 // pred_fallthru
      _
    // Predicated region
    $region50: #{_byol_forward.1} parent=1 // pred_check
      _
    $region51: #{_byol_forward.1} parent=1 // pred_check_branch
      %97 = sbr.rel (0) target = $region53
    $region52: #{_byol_forward.1} parent=1 // pred_region
      _
    $region53: #{_byol_forward.1} parent=1 // pred_fallthru
      _
    // Predicated region
    $region54: #{_byol_forward.1} parent=1 // pred_check
      _
    $region55: #{_byol_forward.1} parent=1 // pred_check_branch
      %99 = sbr.rel (0) target = $region57
    $region56: #{_byol_forward.1} parent=1 // pred_region
      _
    $region57: #{_byol_forward.1} parent=1 // pred_fallthru
      _
    // Predicated region
    $region58: #{_byol_forward.1} parent=1 // pred_check
      _
    $region59: #{_byol_forward.1} parent=1 // pred_check_branch
      %101 = sbr.rel (0) target = $region61
    $region60: #{_byol_forward.1} parent=1 // pred_region
      _
    $region61: #{_byol_forward.1} parent=1 // pred_fallthru
      _
    // Predicated region
    $region62: #{_byol_forward.1} parent=1 // pred_check
      _
    $region63: #{_byol_forward.1} parent=1 // pred_check_branch
      %103 = sbr.rel (0) target = $region65
    $region64: #{_byol_forward.1} parent=1 // pred_region
      _
    $region65: #{_byol_forward.1} parent=1 // pred_fallthru
      _
    // Predicated region
    $region66: #{_byol_forward.1} parent=1 // pred_check
      _
    $region67: #{_byol_forward.1} parent=1 // pred_check_branch
      %105 = sbr.rel (0) target = $region69
    $region68: #{_byol_forward.1} parent=1 // pred_region
      _
    $region69: #{_byol_forward.1} parent=1 // pred_fallthru
      _
    // Predicated region
    $region70: #{_byol_forward.1} parent=1 // pred_check
      _
    $region71: #{_byol_forward.1} parent=1 // pred_check_branch
      %107 = sbr.rel (0) target = $region73
    $region72: #{_byol_forward.1} parent=1 // pred_region
      _
    $region73: #{_byol_forward.1} parent=1 // pred_fallthru
      _
    // Predicated region
    $region74: #{_byol_forward.1} parent=1 // pred_check
      _
    $region75: #{_byol_forward.1} parent=1 // pred_check_branch
      %109 = sbr.rel (0) target = $region77
    $region76: #{_byol_forward.1} parent=1 // pred_region
      _
    $region77: #{_byol_forward.1} parent=1 // pred_fallthru
      _
    // Predicated region
    $region78: #{_byol_forward.1} parent=1 // pred_check
      _
    $region79: #{_byol_forward.1} parent=1 // pred_check_branch
      %111 = sbr.rel (0) target = $region81
    $region80: #{_byol_forward.1} parent=1 // pred_region
      _
    $region81: #{_byol_forward.1} parent=1 // pred_fallthru
      _
    // Predicated region
    $region82: #{_byol_forward.1} parent=1 // pred_check
      _
    $region83: #{_byol_forward.1} parent=1 // pred_check_branch
      %113 = sbr.rel (0) target = $region85
    $region84: #{_byol_forward.1} parent=1 // pred_region
      _
    $region85: #{_byol_forward.1} parent=1 // pred_fallthru
      _
    // Predicated region
    $region86: #{_byol_forward.1} parent=1 // pred_check
      _
    $region87: #{_byol_forward.1} parent=1 // pred_check_branch
      %115 = sbr.rel (0) target = $region89
    $region88: #{_byol_forward.1} parent=1 // pred_region
      _
    $region89: #{_byol_forward.1} parent=1 // pred_fallthru
      _
    // Predicated region
    $region90: #{_byol_forward.1} parent=1 // pred_check
      _
    $region91: #{_byol_forward.1} parent=1 // pred_check_branch
      %117 = sbr.rel (0) target = $region93
    $region92: #{_byol_forward.1} parent=1 // pred_region
      _
    $region93: #{_byol_forward.1} parent=1 // pred_fallthru
      _
    // Predicated region
    $region94: #{_byol_forward.1} parent=1 // pred_check
      _
    $region95: #{_byol_forward.1} parent=1 // pred_check_branch
      %119 = sbr.rel (0) target = $region97
    $region96: #{_byol_forward.1} parent=1 // pred_region
      _
    $region97: #{_byol_forward.1} parent=1 // pred_fallthru
      _
    %v120 = vld [vmem:[%s5] sm:$0xff]
    %v121 = vld [vmem:[%s5 + $0x8] sm:$0xff]
    %v122 = vld [vmem:[%s5 + $0x10] sm:$0xff]
    %v123 = vld [vmem:[%s5 + $0x18] sm:$0xff]
    %v124 = vld [vmem:[%s5 + $0x20] sm:$0xff]
    %v125 = vld [vmem:[%s5 + $0x28] sm:$0xff]
    %v126 = vld [vmem:[%s5 + $0x30] sm:$0xff]
    %v127 = vld [vmem:[%s5 + $0x38] sm:$0xff]
    %v128 = vld [vmem:[%s5 + $0x40] sm:$0xff]
    %v129 = vld [vmem:[%s5 + $0x48] sm:$0xff]
    %v130 = vld [vmem:[%s5 + $0x50] sm:$0xff]
    %v131 = vld [vmem:[%s5 + $0x58] sm:$0xff]
    %v132 = vld [vmem:[%s5 + $0x60] sm:$0xff]
    %v133 = vld [vmem:[%s5 + $0x68] sm:$0xff]
    %v134 = vld [vmem:[%s5 + $0x70] sm:$0xff]
    %v135 = vld [vmem:[%s5 + $0x78] sm:$0xff]
    %v136 = vld [vmem:[%s5 + $0x80] sm:$0xff]
    %v137 = vld [vmem:[%s5 + $0x88] sm:$0xff]
    %v138 = vld [vmem:[%s5 + $0x90] sm:$0xff]
    %v139 = vld [vmem:[%s5 + $0x98] sm:$0xff]
    %v140 = vld [vmem:[%s5 + $0xa0] sm:$0xff]
    %v141 = vld [vmem:[%s5 + $0xa8] sm:$0xff]
    %v142 = vld [vmem:[%s5 + $0xb0] sm:$0xff]
    %v143 = vld [vmem:[%s5 + $0xb8] sm:$0xff]
    %v144 = vld [vmem:[%s5 + $0xc0] sm:$0xff]
    %v145 = vld [vmem:[%s5 + $0xc8] sm:$0xff]
    %v146 = vld [vmem:[%s5 + $0xd0] sm:$0xff]
    %v147 = vld [vmem:[%s5 + $0xd8] sm:$0xff]
    %v148 = vld [vmem:[%s5 + $0xe0] sm:$0xff]
    %v149 = vld [vmem:[%s5 + $0xe8] sm:$0xff]
    %v150 = vld [vmem:[%s5 + $0xf0] sm:$0xff]
    %v151 = vld [vmem:[%s5 + $0xf8] sm:$0xff]
    %v152 = vld [vmem:[%s7] sm:$0x1]
    %v153 = vld [vmem:[%s9] sm:$0xff]
    %v154 = vld [vmem:[%s9 + $0x8] sm:$0xff]
    %v155 = vld [vmem:[%s9 + $0x10] sm:$0xff]
    %v156 = vld [vmem:[%s9 + $0x18] sm:$0xff]
    %v157 = vld [vmem:[%s9 + $0x20] sm:$0xff]
    %v158 = vld [vmem:[%s9 + $0x28] sm:$0xff]
    %v159 = vld [vmem:[%s9 + $0x30] sm:$0xff]
    %v160 = vld [vmem:[%s9 + $0x38] sm:$0xff]
    %v161 = vld [vmem:[%s11] sm:$0x1]
    %v162 = vld [vmem:[%s13] sm:$0x1]
    %v163 = vld [vmem:[%s15] sm:$0x1]
    %v164 = vld [vmem:[%s17] sm:$0xff]
    %v165 = vld [vmem:[%s17 + $0x8] sm:$0xff]
    %v166 = vld [vmem:[%s17 + $0x10] sm:$0xff]
    %v167 = vld [vmem:[%s17 + $0x18] sm:$0xff]
    %v168 = vld [vmem:[%s17 + $0x20] sm:$0xff]
    %v169 = vld [vmem:[%s17 + $0x28] sm:$0xff]
    %v170 = vld [vmem:[%s17 + $0x30] sm:$0xff]
    %v171 = vld [vmem:[%s17 + $0x38] sm:$0xff]
    %v172 = vld [vmem:[%s19] sm:$0x1]
    %v173 = vld [vmem:[%s21] sm:$0xff]
    %v174 = vld [vmem:[%s21 + $0x8] sm:$0xff]
    %v175 = vld [vmem:[%s21 + $0x10] sm:$0xff]
    %v176 = vld [vmem:[%s21 + $0x18] sm:$0xff]
    %v177 = vld [vmem:[%s21 + $0x20] sm:$0xff]
    %v178 = vld [vmem:[%s21 + $0x28] sm:$0xff]
    %v179 = vld [vmem:[%s21 + $0x30] sm:$0xff]
    %v180 = vld [vmem:[%s21 + $0x38] sm:$0xff]
    %v181 = vld [vmem:[%s21 + $0x40] sm:$0xff]
    %v182 = vld [vmem:[%s21 + $0x48] sm:$0xff]
    %v183 = vld [vmem:[%s21 + $0x50] sm:$0xff]
    %v184 = vld [vmem:[%s21 + $0x58] sm:$0xff]
    %v185 = vld [vmem:[%s21 + $0x60] sm:$0xff]
    %v186 = vld [vmem:[%s21 + $0x68] sm:$0xff]
    %v187 = vld [vmem:[%s21 + $0x70] sm:$0xff]
    %v188 = vld [vmem:[%s21 + $0x78] sm:$0xff]
    %v189 = vld [vmem:[%s21 + $0x80] sm:$0xff]
    %v190 = vld [vmem:[%s21 + $0x88] sm:$0xff]
    %v191 = vld [vmem:[%s21 + $0x90] sm:$0xff]
    %v192 = vld [vmem:[%s21 + $0x98] sm:$0xff]
    %v193 = vld [vmem:[%s21 + $0xa0] sm:$0xff]
    %v194 = vld [vmem:[%s21 + $0xa8] sm:$0xff]
    %v195 = vld [vmem:[%s21 + $0xb0] sm:$0xff]
    %v196 = vld [vmem:[%s21 + $0xb8] sm:$0xff]
    %v197 = vld [vmem:[%s21 + $0xc0] sm:$0xff]
    %v198 = vld [vmem:[%s21 + $0xc8] sm:$0xff]
    %v199 = vld [vmem:[%s21 + $0xd0] sm:$0xff]
    %v200 = vld [vmem:[%s21 + $0xd8] sm:$0xff]
    %v201 = vld [vmem:[%s21 + $0xe0] sm:$0xff]
    %v202 = vld [vmem:[%s21 + $0xe8] sm:$0xff]
    %v203 = vld [vmem:[%s21 + $0xf0] sm:$0xff]
    %v204 = vld [vmem:[%s21 + $0xf8] sm:$0xff]
    %v205 = vmul.f32 %v173, 0.996
    %v206 = vmul.f32 %v174, 0.996
    %v207 = vmul.f32 %v175, 0.996
    %v208 = vmul.f32 %v176, 0.996
    %v209 = vmul.f32 %v177, 0.996
    %v210 = vmul.f32 %v178, 0.996
    %v211 = vmul.f32 %v179, 0.996
    %v212 = vmul.f32 %v180, 0.996
    %v213 = vmul.f32 %v181, 0.996
    %v214 = vmul.f32 %v182, 0.996
    %v215 = vmul.f32 %v183, 0.996
    %v216 = vmul.f32 %v184, 0.996
    %v217 = vmul.f32 %v185, 0.996
    %v218 = vmul.f32 %v186, 0.996
    %v219 = vmul.f32 %v187, 0.996
    %v220 = vmul.f32 %v188, 0.996
    %v221 = vmul.f32 %v189, 0.996
    %v222 = vmul.f32 %v190, 0.996
    %v223 = vmul.f32 %v191, 0.996
    %v224 = vmul.f32 %v192, 0.996
    %v225 = vmul.f32 %v193, 0.996
    %v226 = vmul.f32 %v194, 0.996
    %v227 = vmul.f32 %v195, 0.996
    %v228 = vmul.f32 %v196, 0.996
    %v229 = vmul.f32 %v197, 0.996
    %v230 = vmul.f32 %v198, 0.996
    %v231 = vmul.f32 %v199, 0.996
    %v232 = vmul.f32 %v200, 0.996
    %v233 = vmul.f32 %v201, 0.996
    %v234 = vmul.f32 %v202, 0.996
    %v235 = vmul.f32 %v203, 0.996
    %v236 = vmul.f32 %v204, 0.996
    %v237 = vmul.f32 %v120, 0.004
    %v238 = vmul.f32 %v121, 0.004
    %v239 = vmul.f32 %v122, 0.004
    %v240 = vmul.f32 %v123, 0.004
    %v241 = vmul.f32 %v124, 0.004
    %v242 = vmul.f32 %v125, 0.004
    %v243 = vmul.f32 %v126, 0.004
    %v244 = vmul.f32 %v127, 0.004
    %v245 = vmul.f32 %v128, 0.004
    %v246 = vmul.f32 %v129, 0.004
    %v247 = vmul.f32 %v130, 0.004
    %v248 = vmul.f32 %v131, 0.004
    %v249 = vmul.f32 %v132, 0.004
    %v250 = vmul.f32 %v133, 0.004
    %v251 = vmul.f32 %v134, 0.004
    %v252 = vmul.f32 %v135, 0.004
    %v253 = vmul.f32 %v136, 0.004
    %v254 = vmul.f32 %v137, 0.004
    %v255 = vmul.f32 %v138, 0.004
    %v256 = vmul.f32 %v139, 0.004
    %v257 = vmul.f32 %v140, 0.004
    %v258 = vmul.f32 %v141, 0.004
    %v259 = vmul.f32 %v142, 0.004
    %v260 = vmul.f32 %v143, 0.004
    %v261 = vmul.f32 %v144, 0.004
    %v262 = vmul.f32 %v145, 0.004
    %v263 = vmul.f32 %v146, 0.004
    %v264 = vmul.f32 %v147, 0.004
    %v265 = vmul.f32 %v148, 0.004
    %v266 = vmul.f32 %v149, 0.004
    %v267 = vmul.f32 %v150, 0.004
    %v268 = vmul.f32 %v151, 0.004
    %v269 = vadd.f32 %v205, %v237
    %v270 = vadd.f32 %v206, %v238
    %v271 = vadd.f32 %v207, %v239
    %v272 = vadd.f32 %v208, %v240
    %v273 = vadd.f32 %v209, %v241
    %v274 = vadd.f32 %v210, %v242
    %v275 = vadd.f32 %v211, %v243
    %v276 = vadd.f32 %v212, %v244
    %v277 = vadd.f32 %v213, %v245
    %v278 = vadd.f32 %v214, %v246
    %v279 = vadd.f32 %v215, %v247
    %v280 = vadd.f32 %v216, %v248
    %v281 = vadd.f32 %v217, %v249
    %v282 = vadd.f32 %v218, %v250
    %v283 = vadd.f32 %v219, %v251
    %v284 = vadd.f32 %v220, %v252
    %v285 = vadd.f32 %v221, %v253
    %v286 = vadd.f32 %v222, %v254
    %v287 = vadd.f32 %v223, %v255
    %v288 = vadd.f32 %v224, %v256
    %v289 = vadd.f32 %v225, %v257
    %v290 = vadd.f32 %v226, %v258
    %v291 = vadd.f32 %v227, %v259
    %v292 = vadd.f32 %v228, %v260
    %v293 = vadd.f32 %v229, %v261
    %v294 = vadd.f32 %v230, %v262
    %v295 = vadd.f32 %v231, %v263
    %v296 = vadd.f32 %v232, %v264
    %v297 = vadd.f32 %v233, %v265
    %v298 = vadd.f32 %v234, %v266
    %v299 = vadd.f32 %v235, %v267
    %v300 = vadd.f32 %v236, %v268
    %vm301 = vcmask 523264
    %302 = vst.msk [vmem:[%s51] sm:$0xff] %vm301, %v269
    %303 = vst.msk [vmem:[%s51 + $0x8] sm:$0xff] %vm301, %v270
    %304 = vst.msk [vmem:[%s51 + $0x10] sm:$0xff] %vm301, %v271
    %305 = vst.msk [vmem:[%s51 + $0x18] sm:$0xff] %vm301, %v272
    %306 = vst.msk [vmem:[%s51 + $0x20] sm:$0xff] %vm301, %v273
    %307 = vst.msk [vmem:[%s51 + $0x28] sm:$0xff] %vm301, %v274
    %308 = vst.msk [vmem:[%s51 + $0x30] sm:$0xff] %vm301, %v275
    %309 = vst.msk [vmem:[%s51 + $0x38] sm:$0xff] %vm301, %v276
    %310 = vst.msk [vmem:[%s51 + $0x40] sm:$0xff] %vm301, %v277
    %311 = vst.msk [vmem:[%s51 + $0x48] sm:$0xff] %vm301, %v278
    %312 = vst.msk [vmem:[%s51 + $0x50] sm:$0xff] %vm301, %v279
    %313 = vst.msk [vmem:[%s51 + $0x58] sm:$0xff] %vm301, %v280
    %314 = vst.msk [vmem:[%s51 + $0x60] sm:$0xff] %vm301, %v281
    %315 = vst.msk [vmem:[%s51 + $0x68] sm:$0xff] %vm301, %v282
    %316 = vst.msk [vmem:[%s51 + $0x70] sm:$0xff] %vm301, %v283
    %317 = vst.msk [vmem:[%s51 + $0x78] sm:$0xff] %vm301, %v284
    %318 = vst.msk [vmem:[%s51 + $0x80] sm:$0xff] %vm301, %v285
    %319 = vst.msk [vmem:[%s51 + $0x88] sm:$0xff] %vm301, %v286
    %320 = vst.msk [vmem:[%s51 + $0x90] sm:$0xff] %vm301, %v287
    %321 = vst.msk [vmem:[%s51 + $0x98] sm:$0xff] %vm301, %v288
    %322 = vst.msk [vmem:[%s51 + $0xa0] sm:$0xff] %vm301, %v289
    %323 = vst.msk [vmem:[%s51 + $0xa8] sm:$0xff] %vm301, %v290
    %324 = vst.msk [vmem:[%s51 + $0xb0] sm:$0xff] %vm301, %v291
    %325 = vst.msk [vmem:[%s51 + $0xb8] sm:$0xff] %vm301, %v292
    %326 = vst.msk [vmem:[%s51 + $0xc0] sm:$0xff] %vm301, %v293
    %327 = vst.msk [vmem:[%s51 + $0xc8] sm:$0xff] %vm301, %v294
    %328 = vst.msk [vmem:[%s51 + $0xd0] sm:$0xff] %vm301, %v295
    %329 = vst.msk [vmem:[%s51 + $0xd8] sm:$0xff] %vm301, %v296
    %330 = vst.msk [vmem:[%s51 + $0xe0] sm:$0xff] %vm301, %v297
    %331 = vst.msk [vmem:[%s51 + $0xe8] sm:$0xff] %vm301, %v298
    %332 = vst.msk [vmem:[%s51 + $0xf0] sm:$0xff] %vm301, %v299
    %333 = vst.msk [vmem:[%s51 + $0xf8] sm:$0xff] %vm301, %v300
    %v334 = vld [vmem:[%s23] sm:$0x1]
    %v335 = vmul.f32 %v334, 0.996
    %v336 = vmul.f32 %v152, 0.004
    %v337 = vadd.f32 %v335, %v336
    %vm338 = vcmask 516096
    %339 = vst.msk [vmem:[%s53] sm:$0x1] %vm338, %v337
    %v340 = vld [vmem:[%s25] sm:$0xff]
    %v341 = vld [vmem:[%s25 + $0x8] sm:$0xff]
    %v342 = vld [vmem:[%s25 + $0x10] sm:$0xff]
    %v343 = vld [vmem:[%s25 + $0x18] sm:$0xff]
    %v344 = vld [vmem:[%s25 + $0x20] sm:$0xff]
    %v345 = vld [vmem:[%s25 + $0x28] sm:$0xff]
    %v346 = vld [vmem:[%s25 + $0x30] sm:$0xff]
    %v347 = vld [vmem:[%s25 + $0x38] sm:$0xff]
    %v348 = vmul.f32 %v340, 0.996
    %v349 = vmul.f32 %v341, 0.996
    %v350 = vmul.f32 %v342, 0.996
    %v351 = vmul.f32 %v343, 0.996
    %v352 = vmul.f32 %v344, 0.996
    %v353 = vmul.f32 %v345, 0.996
    %v354 = vmul.f32 %v346, 0.996
    %v355 = vmul.f32 %v347, 0.996
    %v356 = vmul.f32 %v153, 0.004
    %v357 = vmul.f32 %v154, 0.004
    %v358 = vmul.f32 %v155, 0.004
    %v359 = vmul.f32 %v156, 0.004
    %v360 = vmul.f32 %v157, 0.004
    %v361 = vmul.f32 %v158, 0.004
    %v362 = vmul.f32 %v159, 0.004
    %v363 = vmul.f32 %v160, 0.004
    %v364 = vadd.f32 %v348, %v356
    %v365 = vadd.f32 %v349, %v357
    %v366 = vadd.f32 %v350, %v358
    %v367 = vadd.f32 %v351, %v359
    %v368 = vadd.f32 %v352, %v360
    %v369 = vadd.f32 %v353, %v361
    %v370 = vadd.f32 %v354, %v362
    %v371 = vadd.f32 %v355, %v363
    %372 = vst.msk [vmem:[%s55] sm:$0xff] %vm301, %v364
    %373 = vst.msk [vmem:[%s55 + $0x8] sm:$0xff] %vm301, %v365
    %374 = vst.msk [vmem:[%s55 + $0x10] sm:$0xff] %vm301, %v366
    %375 = vst.msk [vmem:[%s55 + $0x18] sm:$0xff] %vm301, %v367
    %376 = vst.msk [vmem:[%s55 + $0x20] sm:$0xff] %vm301, %v368
    %377 = vst.msk [vmem:[%s55 + $0x28] sm:$0xff] %vm301, %v369
    %378 = vst.msk [vmem:[%s55 + $0x30] sm:$0xff] %vm301, %v370
    %379 = vst.msk [vmem:[%s55 + $0x38] sm:$0xff] %vm301, %v371
    %v380 = vld [vmem:[%s27] sm:$0x1]
    %v381 = vmul.f32 %v380, 0.996
    %v382 = vmul.f32 %v161, 0.004
    %v383 = vadd.f32 %v381, %v382
    %384 = vst.msk [vmem:[%s57] sm:$0x1] %vm338, %v383
    %v385 = vld [vmem:[%s29] sm:$0x1]
    %v386 = vmul.f32 %v385, 0.996
    %v387 = vmul.f32 %v162, 0.004
    %v388 = vadd.f32 %v386, %v387
    %389 = vst.msk [vmem:[%s59] sm:$0x1] %vm338, %v388
    %v390 = vld [vmem:[%s31] sm:$0x1]
    %v391 = vmul.f32 %v390, 0.996
    %v392 = vmul.f32 %v163, 0.004
    %v393 = vadd.f32 %v391, %v392
    %394 = vst.msk [vmem:[%s61] sm:$0x1] %vm338, %v393
    %v395 = vld [vmem:[%s33] sm:$0xff]
    %v396 = vld [vmem:[%s33 + $0x8] sm:$0xff]
    %v397 = vld [vmem:[%s33 + $0x10] sm:$0xff]
    %v398 = vld [vmem:[%s33 + $0x18] sm:$0xff]
    %v399 = vld [vmem:[%s33 + $0x20] sm:$0xff]
    %v400 = vld [vmem:[%s33 + $0x28] sm:$0xff]
    %v401 = vld [vmem:[%s33 + $0x30] sm:$0xff]
    %v402 = vld [vmem:[%s33 + $0x38] sm:$0xff]
    %v403 = vmul.f32 %v395, 0.996
    %v404 = vmul.f32 %v396, 0.996
    %v405 = vmul.f32 %v397, 0.996
    %v406 = vmul.f32 %v398, 0.996
    %v407 = vmul.f32 %v399, 0.996
    %v408 = vmul.f32 %v400, 0.996
    %v409 = vmul.f32 %v401, 0.996
    %v410 = vmul.f32 %v402, 0.996
    %v411 = vmul.f32 %v164, 0.004
    %v412 = vmul.f32 %v165, 0.004
    %v413 = vmul.f32 %v166, 0.004
    %v414 = vmul.f32 %v167, 0.004
    %v415 = vmul.f32 %v168, 0.004
    %v416 = vmul.f32 %v169, 0.004
    %v417 = vmul.f32 %v170, 0.004
    %v418 = vmul.f32 %v171, 0.004
    %v419 = vadd.f32 %v403, %v411
    %v420 = vadd.f32 %v404, %v412
    %v421 = vadd.f32 %v405, %v413
    %v422 = vadd.f32 %v406, %v414
    %v423 = vadd.f32 %v407, %v415
    %v424 = vadd.f32 %v408, %v416
    %v425 = vadd.f32 %v409, %v417
    %v426 = vadd.f32 %v410, %v418
    %vm427 = vcmask 261120
    %428 = vst.msk [vmem:[%s63] sm:$0xff] %vm427, %v419
    %429 = vst.msk [vmem:[%s63 + $0x8] sm:$0xff] %vm427, %v420
    %430 = vst.msk [vmem:[%s63 + $0x10] sm:$0xff] %vm427, %v421
    %431 = vst.msk [vmem:[%s63 + $0x18] sm:$0xff] %vm427, %v422
    %432 = vst.msk [vmem:[%s63 + $0x20] sm:$0xff] %vm427, %v423
    %433 = vst.msk [vmem:[%s63 + $0x28] sm:$0xff] %vm427, %v424
    %434 = vst.msk [vmem:[%s63 + $0x30] sm:$0xff] %vm427, %v425
    %435 = vst.msk [vmem:[%s63 + $0x38] sm:$0xff] %vm427, %v426
    %v436 = vld [vmem:[%s35] sm:$0x1]
    %v437 = vmul.f32 %v436, 0.996
    %v438 = vmul.f32 %v172, 0.004
    %v439 = vadd.f32 %v437, %v438
    %vm440 = vcmask 253952
    %441 = vst.msk [vmem:[%s65] sm:$0x1] %vm440, %v439
    %v442 = vld [vmem:[%s1] sm:$0xff]
    %v443 = vld [vmem:[%s1 + $0x8] sm:$0xff]
    %v444 = vld [vmem:[%s3] sm:$0xff]
    %v445 = vld [vmem:[%s3 + $0x8] sm:$0xff]
    %v447 = vperm.slane %v152, 0
    %449 = vmatpush.msra.mxu0 %v135
    %450 = vmatpush.msra.mxu0 %v134
    %451 = vmatpush.msra.mxu0 %v133
    %452 = vmatpush.msra.mxu0 %v132
    %453 = vmatpush.msra.mxu0 %v131
    %454 = vmatpush.msra.mxu0 %v130
    %455 = vmatpush.msra.mxu0 %v129
    %456 = vmatpush.msra.mxu0 %v128
    %457 = vmatpush.msra.mxu0 %v127
    %458 = vmatpush.msra.mxu0 %v126
    %459 = vmatpush.msra.mxu0 %v125
    %460 = vmatpush.msra.mxu0 %v124
    %461 = vmatpush.msra.mxu0 %v123
    %462 = vmatpush.msra.mxu0 %v122
    %463 = vmatpush.msra.mxu0 %v121
    %464 = vmatpush.msra.mxu0 %v120
    %465 = vmatmul.f32.gmra.mxu0 %v442
    %v466 = vpop.f32.mrf.mxu0
    %v467 = vadd.f32 %v447, %v466
    %468 = vmatmul.f32.gmra.mxu0 %v444
    %v469 = vpop.f32.mrf.mxu0
    %v470 = vadd.f32 %v447, %v469
    %471 = vdwg.mxu0
    %472 = vmatpush.msra.mxu0 %v151
    %473 = vmatpush.msra.mxu0 %v150
    %474 = vmatpush.msra.mxu0 %v149
    %475 = vmatpush.msra.mxu0 %v148
    %476 = vmatpush.msra.mxu0 %v147
    %477 = vmatpush.msra.mxu0 %v146
    %478 = vmatpush.msra.mxu0 %v145
    %479 = vmatpush.msra.mxu0 %v144
    %480 = vmatpush.msra.mxu0 %v143
    %481 = vmatpush.msra.mxu0 %v142
    %482 = vmatpush.msra.mxu0 %v141
    %483 = vmatpush.msra.mxu0 %v140
    %484 = vmatpush.msra.mxu0 %v139
    %485 = vmatpush.msra.mxu0 %v138
    %486 = vmatpush.msra.mxu0 %v137
    %487 = vmatpush.msra.mxu0 %v136
    %488 = vmatmul.f32.gmra.mxu0 %v443
    %v489 = vpop.f32.mrf.mxu0
    %v490 = vadd.f32 %v467, %v489
    %491 = vmatmul.f32.gmra.mxu0 %v445
    %v492 = vpop.f32.mrf.mxu0
    %v493 = vadd.f32 %v470, %v492
    %494 = vdwg.mxu0
    %v496 = vperm.slane %v161, 0
    %v499 = vsel %vm301, %v490, 0
    %v502 = vsel %vm301, %v493, 0
    %504 = vmatpush.msra.mxu0 0.0
    %505 = vmatpush.msra.mxu0 0.0
    %506 = vmatpush.msra.mxu0 0.0
    %507 = vmatpush.msra.mxu0 0.0
    %508 = vmatpush.msra.mxu0 0.0
    %509 = vmatpush.msra.mxu0 0.0
    %510 = vmatpush.msra.mxu0 0.0
    %511 = vmatpush.msra.mxu0 0.0
    %512 = vmatpush.msra.mxu0 %v160
    %513 = vmatpush.msra.mxu0 %v159
    %514 = vmatpush.msra.mxu0 %v158
    %515 = vmatpush.msra.mxu0 %v157
    %516 = vmatpush.msra.mxu0 %v156
    %517 = vmatpush.msra.mxu0 %v155
    %518 = vmatpush.msra.mxu0 %v154
    %519 = vmatpush.msra.mxu0 %v153
    %520 = vmatmul.f32.gmra.mxu0 %v499
    %v521 = vpop.f32.mrf.mxu0
    %v522 = vadd.f32 %v496, %v521
    %523 = vmatmul.f32.gmra.mxu0 %v502
    %v524 = vpop.f32.mrf.mxu0
    %v525 = vadd.f32 %v496, %v524
    %526 = vdwg.mxu0
    %v527 = vsel %vm301, %v522, 0.0
    %v528 = vrot.slane %v527, 4
    %v529 = vadd.f32 %v527, %v528
    %v530 = vrot.slane %v529, 2
    %v531 = vadd.f32 %v529, %v530
    %v532 = vrot.slane %v531, 1
    %v533 = vadd.f32 %v531, %v532
    %v534 = vsel %vm301, %v525, 0.0
    %v535 = vrot.slane %v534, 4
    %v536 = vadd.f32 %v534, %v535
    %v537 = vrot.slane %v536, 2
    %v538 = vadd.f32 %v536, %v537
    %v539 = vrot.slane %v538, 1
    %v540 = vadd.f32 %v538, %v539
    %v541 = vrcp.pop 8.0
    %v542 = vmul.f32 8.0, %v541
    %v543 = vsub.f32 1.0, %v542
    %v544 = vmul.f32 %v541, %v543
    %v545 = vadd.f32 %v541, %v544
    %vm546 = vweird.f32 %v541
    %v547 = vsel %vm546, %v541, %v545
    %v548 = vmul.f32 %v533, %v547
    %v549 = vmul.f32 %v540, %v547
    %v550 = vsub.f32 %v522, %v548
    %v551 = vsub.f32 %v525, %v549
    %v552 = vmul.f32 %v550, %v550
    %v553 = vmul.f32 %v551, %v551
    %v554 = vsel %vm301, %v552, 0.0
    %v555 = vrot.slane %v554, 4
    %v556 = vadd.f32 %v554, %v555
    %v557 = vrot.slane %v556, 2
    %v558 = vadd.f32 %v556, %v557
    %v559 = vrot.slane %v558, 1
    %v560 = vadd.f32 %v558, %v559
    %v561 = vsel %vm301, %v553, 0.0
    %v562 = vrot.slane %v561, 4
    %v563 = vadd.f32 %v561, %v562
    %v564 = vrot.slane %v563, 2
    %v565 = vadd.f32 %v563, %v564
    %v566 = vrot.slane %v565, 1
    %v567 = vadd.f32 %v565, %v566
    %v568 = vmul.f32 %v560, %v547
    %v569 = vmul.f32 %v567, %v547
    %v570 = vadd.f32 %v568, 1e-05
    %v571 = vadd.f32 %v569, 1e-05
    %v572 = vrsqrt.pop %v570
    %v573 = vmul.f32 %v572, %v570
    %v574 = vmul.f32 %v573, %v572
    %v575 = vmul.f32 0.5, %v574
    %v576 = vsub.f32 1.5, %v575
    %v577 = vmul.f32 %v572, %v576
    %vm578 = vweird.f32 %v570
    %vm579 = vweird.f32 %v572
    %vm580 = vmor %vm578, %vm579
    %v581 = vsel %vm580, %v572, %v577
    %v582 = vrsqrt.pop %v571
    %v583 = vmul.f32 %v582, %v571
    %v584 = vmul.f32 %v583, %v582
    %v585 = vmul.f32 0.5, %v584
    %v586 = vsub.f32 1.5, %v585
    %v587 = vmul.f32 %v582, %v586
    %vm588 = vweird.f32 %v571
    %vm589 = vweird.f32 %v582
    %vm590 = vmor %vm588, %vm589
    %v591 = vsel %vm590, %v582, %v587
    %v592 = vmul.f32 %v550, %v581
    %v593 = vmul.f32 %v551, %v591
    %v595 = vperm.slane %v162, 0
    %v597 = vmul.f32 %v592, %v595
    %v598 = vmul.f32 %v593, %v595
    %v600 = vperm.slane %v163, 0
    %v602 = vadd.f32 %v597, %v600
    %v603 = vadd.f32 %v598, %v600
    %v604 = vmax.f32 %v602, 0.0
    %v605 = vmax.f32 %v603, 0.0
    %v607 = vperm.slane %v172, 0
    %v610 = vsel %vm301, %v604, 0
    %v613 = vsel %vm301, %v605, 0
    %615 = vmatpush.msra.mxu0 0.0
    %616 = vmatpush.msra.mxu0 0.0
    %617 = vmatpush.msra.mxu0 0.0
    %618 = vmatpush.msra.mxu0 0.0
    %619 = vmatpush.msra.mxu0 0.0
    %620 = vmatpush.msra.mxu0 0.0
    %621 = vmatpush.msra.mxu0 0.0
    %622 = vmatpush.msra.mxu0 0.0
    %623 = vmatpush.msra.mxu0 %v171
    %624 = vmatpush.msra.mxu0 %v170
    %625 = vmatpush.msra.mxu0 %v169
    %626 = vmatpush.msra.mxu0 %v168
    %627 = vmatpush.msra.mxu0 %v167
    %628 = vmatpush.msra.mxu0 %v166
    %629 = vmatpush.msra.mxu0 %v165
    %630 = vmatpush.msra.mxu0 %v164
    %631 = vmatmul.f32.gmra.mxu0 %v610
    %v632 = vpop.f32.mrf.mxu0
    %v633 = vadd.f32 %v607, %v632
    %634 = vmatmul.f32.gmra.mxu0 %v613
    %v635 = vpop.f32.mrf.mxu0
    %v636 = vadd.f32 %v607, %v635
    %637 = vdwg.mxu0
    %v639 = vperm.slane %v337, 0
    %641 = vmatpush.msra.mxu0 %v284
    %642 = vmatpush.msra.mxu0 %v283
    %643 = vmatpush.msra.mxu0 %v282
    %644 = vmatpush.msra.mxu0 %v281
    %645 = vmatpush.msra.mxu0 %v280
    %646 = vmatpush.msra.mxu0 %v279
    %647 = vmatpush.msra.mxu0 %v278
    %648 = vmatpush.msra.mxu0 %v277
    %649 = vmatpush.msra.mxu0 %v276
    %650 = vmatpush.msra.mxu0 %v275
    %651 = vmatpush.msra.mxu0 %v274
    %652 = vmatpush.msra.mxu0 %v273
    %653 = vmatpush.msra.mxu0 %v272
    %654 = vmatpush.msra.mxu0 %v271
    %655 = vmatpush.msra.mxu0 %v270
    %656 = vmatpush.msra.mxu0 %v269
    %657 = vmatmul.f32.gmra.mxu0 %v442
    %v658 = vpop.f32.mrf.mxu0
    %v659 = vadd.f32 %v639, %v658
    %660 = vmatmul.f32.gmra.mxu0 %v444
    %v661 = vpop.f32.mrf.mxu0
    %v662 = vadd.f32 %v639, %v661
    %663 = vdwg.mxu0
    %664 = vmatpush.msra.mxu0 %v300
    %665 = vmatpush.msra.mxu0 %v299
    %666 = vmatpush.msra.mxu0 %v298
    %667 = vmatpush.msra.mxu0 %v297
    %668 = vmatpush.msra.mxu0 %v296
    %669 = vmatpush.msra.mxu0 %v295
    %670 = vmatpush.msra.mxu0 %v294
    %671 = vmatpush.msra.mxu0 %v293
    %672 = vmatpush.msra.mxu0 %v292
    %673 = vmatpush.msra.mxu0 %v291
    %674 = vmatpush.msra.mxu0 %v290
    %675 = vmatpush.msra.mxu0 %v289
    %676 = vmatpush.msra.mxu0 %v288
    %677 = vmatpush.msra.mxu0 %v287
    %678 = vmatpush.msra.mxu0 %v286
    %679 = vmatpush.msra.mxu0 %v285
    %680 = vmatmul.f32.gmra.mxu0 %v443
    %v681 = vpop.f32.mrf.mxu0
    %v682 = vadd.f32 %v659, %v681
    %683 = vmatmul.f32.gmra.mxu0 %v445
    %v684 = vpop.f32.mrf.mxu0
    %v685 = vadd.f32 %v662, %v684
    %686 = vdwg.mxu0
    %v688 = vperm.slane %v383, 0
    %v691 = vsel %vm301, %v682, 0
    %v694 = vsel %vm301, %v685, 0
    %696 = vmatpush.msra.mxu0 0.0
    %697 = vmatpush.msra.mxu0 0.0
    %698 = vmatpush.msra.mxu0 0.0
    %699 = vmatpush.msra.mxu0 0.0
    %700 = vmatpush.msra.mxu0 0.0
    %701 = vmatpush.msra.mxu0 0.0
    %702 = vmatpush.msra.mxu0 0.0
    %703 = vmatpush.msra.mxu0 0.0
    %704 = vmatpush.msra.mxu0 %v371
    %705 = vmatpush.msra.mxu0 %v370
    %706 = vmatpush.msra.mxu0 %v369
    %707 = vmatpush.msra.mxu0 %v368
    %708 = vmatpush.msra.mxu0 %v367
    %709 = vmatpush.msra.mxu0 %v366
    %710 = vmatpush.msra.mxu0 %v365
    %711 = vmatpush.msra.mxu0 %v364
    %712 = vmatmul.f32.gmra.mxu0 %v691
    %v713 = vpop.f32.mrf.mxu0
    %v714 = vadd.f32 %v688, %v713
    %715 = vmatmul.f32.gmra.mxu0 %v694
    %v716 = vpop.f32.mrf.mxu0
    %v717 = vadd.f32 %v688, %v716
    %718 = vdwg.mxu0
    %v719 = vsel %vm301, %v714, 0.0
    %v720 = vrot.slane %v719, 4
    %v721 = vadd.f32 %v719, %v720
    %v722 = vrot.slane %v721, 2
    %v723 = vadd.f32 %v721, %v722
    %v724 = vrot.slane %v723, 1
    %v725 = vadd.f32 %v723, %v724
    %v726 = vsel %vm301, %v717, 0.0
    %v727 = vrot.slane %v726, 4
    %v728 = vadd.f32 %v726, %v727
    %v729 = vrot.slane %v728, 2
    %v730 = vadd.f32 %v728, %v729
    %v731 = vrot.slane %v730, 1
    %v732 = vadd.f32 %v730, %v731
    %v733 = vmul.f32 %v725, %v547
    %v734 = vmul.f32 %v732, %v547
    %v735 = vsub.f32 %v714, %v733
    %v736 = vsub.f32 %v717, %v734
    %v737 = vmul.f32 %v735, %v735
    %v738 = vmul.f32 %v736, %v736
    %v739 = vsel %vm301, %v737, 0.0
    %v740 = vrot.slane %v739, 4
    %v741 = vadd.f32 %v739, %v740
    %v742 = vrot.slane %v741, 2
    %v743 = vadd.f32 %v741, %v742
    %v744 = vrot.slane %v743, 1
    %v745 = vadd.f32 %v743, %v744
    %v746 = vsel %vm301, %v738, 0.0
    %v747 = vrot.slane %v746, 4
    %v748 = vadd.f32 %v746, %v747
    %v749 = vrot.slane %v748, 2
    %v750 = vadd.f32 %v748, %v749
    %v751 = vrot.slane %v750, 1
    %v752 = vadd.f32 %v750, %v751
    %v753 = vmul.f32 %v745, %v547
    %v754 = vmul.f32 %v752, %v547
    %v755 = vadd.f32 %v753, 1e-05
    %v756 = vadd.f32 %v754, 1e-05
    %v757 = vrsqrt.pop %v755
    %v758 = vmul.f32 %v757, %v755
    %v759 = vmul.f32 %v758, %v757
    %v760 = vmul.f32 0.5, %v759
    %v761 = vsub.f32 1.5, %v760
    %v762 = vmul.f32 %v757, %v761
    %vm763 = vweird.f32 %v755
    %vm764 = vweird.f32 %v757
    %vm765 = vmor %vm763, %vm764
    %v766 = vsel %vm765, %v757, %v762
    %v767 = vrsqrt.pop %v756
    %v768 = vmul.f32 %v767, %v756
    %v769 = vmul.f32 %v768, %v767
    %v770 = vmul.f32 0.5, %v769
    %v771 = vsub.f32 1.5, %v770
    %v772 = vmul.f32 %v767, %v771
    %vm773 = vweird.f32 %v756
    %vm774 = vweird.f32 %v767
    %vm775 = vmor %vm773, %vm774
    %v776 = vsel %vm775, %v767, %v772
    %v777 = vmul.f32 %v735, %v766
    %v778 = vmul.f32 %v736, %v776
    %v780 = vperm.slane %v388, 0
    %v782 = vmul.f32 %v777, %v780
    %v783 = vmul.f32 %v778, %v780
    %v785 = vperm.slane %v393, 0
    %v787 = vadd.f32 %v782, %v785
    %v788 = vadd.f32 %v783, %v785
    %v789 = vmax.f32 %v787, 0.0
    %v790 = vmax.f32 %v788, 0.0
    %v792 = vperm.slane %v439, 0
    %v795 = vsel %vm301, %v789, 0
    %v798 = vsel %vm301, %v790, 0
    %800 = vmatpush.msra.mxu0 0.0
    %801 = vmatpush.msra.mxu0 0.0
    %802 = vmatpush.msra.mxu0 0.0
    %803 = vmatpush.msra.mxu0 0.0
    %804 = vmatpush.msra.mxu0 0.0
    %805 = vmatpush.msra.mxu0 0.0
    %806 = vmatpush.msra.mxu0 0.0
    %807 = vmatpush.msra.mxu0 0.0
    %808 = vmatpush.msra.mxu0 %v426
    %809 = vmatpush.msra.mxu0 %v425
    %810 = vmatpush.msra.mxu0 %v424
    %811 = vmatpush.msra.mxu0 %v423
    %812 = vmatpush.msra.mxu0 %v422
    %813 = vmatpush.msra.mxu0 %v421
    %814 = vmatpush.msra.mxu0 %v420
    %815 = vmatpush.msra.mxu0 %v419
    %816 = vmatmul.f32.gmra.mxu0 %v795
    %v817 = vpop.f32.mrf.mxu0
    %v818 = vadd.f32 %v792, %v817
    %819 = vmatmul.f32.gmra.mxu0 %v798
    %v820 = vpop.f32.mrf.mxu0
    %v821 = vadd.f32 %v792, %v820
    %822 = vdwg.mxu0
    %v823 = vld [vmem:[%s37] sm:$0xff]
    %v824 = vld [vmem:[%s37 + $0x8] sm:$0xff]
    %v825 = vld [vmem:[%s37 + $0x10] sm:$0xff]
    %v826 = vld [vmem:[%s37 + $0x18] sm:$0xff]
    %v827 = vld [vmem:[%s39] sm:$0x1]
    %v829 = vperm.slane %v827, 0
    %v832 = vsel %vm427, %v633, 0
    %v835 = vsel %vm427, %v636, 0
    %837 = vmatpush.msra.mxu0 0.0
    %838 = vmatpush.msra.mxu0 0.0
    %839 = vmatpush.msra.mxu0 0.0
    %840 = vmatpush.msra.mxu0 0.0
    %841 = vmatpush.msra.mxu0 0.0
    %842 = vmatpush.msra.mxu0 0.0
    %843 = vmatpush.msra.mxu0 0.0
    %844 = vmatpush.msra.mxu0 0.0
    %845 = vmatpush.msra.mxu0 0.0
    %846 = vmatpush.msra.mxu0 0.0
    %847 = vmatpush.msra.mxu0 0.0
    %848 = vmatpush.msra.mxu0 0.0
    %849 = vmatpush.msra.mxu0 %v826
    %850 = vmatpush.msra.mxu0 %v825
    %851 = vmatpush.msra.mxu0 %v824
    %852 = vmatpush.msra.mxu0 %v823
    %853 = vmatmul.f32.gmra.mxu0 %v832
    %v854 = vpop.f32.mrf.mxu0
    %v855 = vadd.f32 %v829, %v854
    %856 = vmatmul.f32.gmra.mxu0 %v835
    %v857 = vpop.f32.mrf.mxu0
    %v858 = vadd.f32 %v829, %v857
    %859 = vdwg.mxu0
    %v860 = vld [vmem:[%s41] sm:$0x1]
    %v861 = vld [vmem:[%s43] sm:$0x1]
    %v862 = vsel %vm301, %v855, 0.0
    %v863 = vrot.slane %v862, 4
    %v864 = vadd.f32 %v862, %v863
    %v865 = vrot.slane %v864, 2
    %v866 = vadd.f32 %v864, %v865
    %v867 = vrot.slane %v866, 1
    %v868 = vadd.f32 %v866, %v867
    %v869 = vsel %vm301, %v858, 0.0
    %v870 = vrot.slane %v869, 4
    %v871 = vadd.f32 %v869, %v870
    %v872 = vrot.slane %v871, 2
    %v873 = vadd.f32 %v871, %v872
    %v874 = vrot.slane %v873, 1
    %v875 = vadd.f32 %v873, %v874
    %v876 = vmul.f32 %v868, %v547
    %v877 = vmul.f32 %v875, %v547
    %v878 = vsub.f32 %v855, %v876
    %v879 = vsub.f32 %v858, %v877
    %v880 = vmul.f32 %v878, %v878
    %v881 = vmul.f32 %v879, %v879
    %v882 = vsel %vm301, %v880, 0.0
    %v883 = vrot.slane %v882, 4
    %v884 = vadd.f32 %v882, %v883
    %v885 = vrot.slane %v884, 2
    %v886 = vadd.f32 %v884, %v885
    %v887 = vrot.slane %v886, 1
    %v888 = vadd.f32 %v886, %v887
    %v889 = vsel %vm301, %v881, 0.0
    %v890 = vrot.slane %v889, 4
    %v891 = vadd.f32 %v889, %v890
    %v892 = vrot.slane %v891, 2
    %v893 = vadd.f32 %v891, %v892
    %v894 = vrot.slane %v893, 1
    %v895 = vadd.f32 %v893, %v894
    %v896 = vmul.f32 %v888, %v547
    %v897 = vmul.f32 %v895, %v547
    %v898 = vadd.f32 %v896, 1e-05
    %v899 = vadd.f32 %v897, 1e-05
    %v900 = vrsqrt.pop %v898
    %v901 = vmul.f32 %v900, %v898
    %v902 = vmul.f32 %v901, %v900
    %v903 = vmul.f32 0.5, %v902
    %v904 = vsub.f32 1.5, %v903
    %v905 = vmul.f32 %v900, %v904
    %vm906 = vweird.f32 %v898
    %vm907 = vweird.f32 %v900
    %vm908 = vmor %vm906, %vm907
    %v909 = vsel %vm908, %v900, %v905
    %v910 = vrsqrt.pop %v899
    %v911 = vmul.f32 %v910, %v899
    %v912 = vmul.f32 %v911, %v910
    %v913 = vmul.f32 0.5, %v912
    %v914 = vsub.f32 1.5, %v913
    %v915 = vmul.f32 %v910, %v914
    %vm916 = vweird.f32 %v899
    %vm917 = vweird.f32 %v910
    %vm918 = vmor %vm916, %vm917
    %v919 = vsel %vm918, %v910, %v915
    %v920 = vmul.f32 %v878, %v909
    %v921 = vmul.f32 %v879, %v919
    %v923 = vperm.slane %v860, 0
    %v925 = vmul.f32 %v920, %v923
    %v926 = vmul.f32 %v921, %v923
    %v928 = vperm.slane %v861, 0
    %v930 = vadd.f32 %v925, %v928
    %v931 = vadd.f32 %v926, %v928
    %v932 = vmax.f32 %v930, 0.0
    %v933 = vmax.f32 %v931, 0.0
    %v934 = vld [vmem:[%s45] sm:$0xff]
    %v935 = vld [vmem:[%s45 + $0x8] sm:$0xff]
    %v936 = vld [vmem:[%s45 + $0x10] sm:$0xff]
    %v937 = vld [vmem:[%s45 + $0x18] sm:$0xff]
    %v938 = vld [vmem:[%s45 + $0x20] sm:$0xff]
    %v939 = vld [vmem:[%s45 + $0x28] sm:$0xff]
    %v940 = vld [vmem:[%s45 + $0x30] sm:$0xff]
    %v941 = vld [vmem:[%s45 + $0x38] sm:$0xff]
    %v942 = vld [vmem:[%s47] sm:$0x1]
    %v944 = vperm.slane %v942, 0
    %v947 = vsel %vm301, %v932, 0
    %v950 = vsel %vm301, %v933, 0
    %952 = vmatpush.msra.mxu0 0.0
    %953 = vmatpush.msra.mxu0 0.0
    %954 = vmatpush.msra.mxu0 0.0
    %955 = vmatpush.msra.mxu0 0.0
    %956 = vmatpush.msra.mxu0 0.0
    %957 = vmatpush.msra.mxu0 0.0
    %958 = vmatpush.msra.mxu0 0.0
    %959 = vmatpush.msra.mxu0 0.0
    %960 = vmatpush.msra.mxu0 %v941
    %961 = vmatpush.msra.mxu0 %v940
    %962 = vmatpush.msra.mxu0 %v939
    %963 = vmatpush.msra.mxu0 %v938
    %964 = vmatpush.msra.mxu0 %v937
    %965 = vmatpush.msra.mxu0 %v936
    %966 = vmatpush.msra.mxu0 %v935
    %967 = vmatpush.msra.mxu0 %v934
    %968 = vmatmul.f32.gmra.mxu0 %v947
    %v969 = vpop.f32.mrf.mxu0
    %v970 = vadd.f32 %v944, %v969
    %971 = vmatmul.f32.gmra.mxu0 %v950
    %v972 = vpop.f32.mrf.mxu0
    %v973 = vadd.f32 %v944, %v972
    %974 = vdwg.mxu0
    %v975 = vmul.f32 %v970, %v970
    %v976 = vmul.f32 %v973, %v973
    %v977 = vsel %vm427, %v975, 0.0
    %978 = vadd.xlane.f32.xlu0 %v977
    %v979 = vpop.xlane.xlu0 %978
    %v980 = vsel %vm427, %v976, 0.0
    %981 = vadd.xlane.f32.xlu0 %v980
    %v982 = vpop.xlane.xlu0 %981
    %v983 = vmax.f32 %v979, 1e-24
    %v984 = vmax.f32 %v982, 1e-24
    %v985 = vrsqrt.pop %v983
    %v986 = vmul.f32 %v985, %v983
    %v987 = vmul.f32 %v986, %v985
    %v988 = vmul.f32 0.5, %v987
    %v989 = vsub.f32 1.5, %v988
    %v990 = vmul.f32 %v985, %v989
    %vm991 = vweird.f32 %v983
    %vm992 = vweird.f32 %v985
    %vm993 = vmor %vm991, %vm992
    %v994 = vsel %vm993, %v985, %v990
    %v995 = vrsqrt.pop %v984
    %v996 = vmul.f32 %v995, %v984
    %v997 = vmul.f32 %v996, %v995
    %v998 = vmul.f32 0.5, %v997
    %v999 = vsub.f32 1.5, %v998
    %v1000 = vmul.f32 %v995, %v999
    %vm1001 = vweird.f32 %v984
    %vm1002 = vweird.f32 %v995
    %vm1003 = vmor %vm1001, %vm1002
    %v1004 = vsel %vm1003, %v995, %v1000
    %v1005 = vmul.f32 %v970, %v994
    %v1006 = vmul.f32 %v973, %v1004
    %v1007 = vmul.f32 %v818, %v818
    %v1008 = vmul.f32 %v821, %v821
    %v1009 = vsel %vm427, %v1007, 0.0
    %1010 = vadd.xlane.f32.xlu0 %v1009
    %v1011 = vpop.xlane.xlu0 %1010
    %v1012 = vsel %vm427, %v1008, 0.0
    %1013 = vadd.xlane.f32.xlu0 %v1012
    %v1014 = vpop.xlane.xlu0 %1013
    %v1015 = vmax.f32 %v1011, 1e-24
    %v1016 = vmax.f32 %v1014, 1e-24
    %v1017 = vrsqrt.pop %v1015
    %v1018 = vmul.f32 %v1017, %v1015
    %v1019 = vmul.f32 %v1018, %v1017
    %v1020 = vmul.f32 0.5, %v1019
    %v1021 = vsub.f32 1.5, %v1020
    %v1022 = vmul.f32 %v1017, %v1021
    %vm1023 = vweird.f32 %v1015
    %vm1024 = vweird.f32 %v1017
    %vm1025 = vmor %vm1023, %vm1024
    %v1026 = vsel %vm1025, %v1017, %v1022
    %v1027 = vrsqrt.pop %v1016
    %v1028 = vmul.f32 %v1027, %v1016
    %v1029 = vmul.f32 %v1028, %v1027
    %v1030 = vmul.f32 0.5, %v1029
    %v1031 = vsub.f32 1.5, %v1030
    %v1032 = vmul.f32 %v1027, %v1031
    %vm1033 = vweird.f32 %v1016
    %vm1034 = vweird.f32 %v1027
    %vm1035 = vmor %vm1033, %vm1034
    %v1036 = vsel %vm1035, %v1027, %v1032
    %v1037 = vmul.f32 %v818, %v1026
    %v1038 = vmul.f32 %v821, %v1036
    %v1039 = vmul.f32 %v1005, %v1038
    %v1040 = vmul.f32 %v1006, %v1037
    %v1041 = vadd.f32 %v1039, %v1040
    %v1042 = vsel %vm427, %v1041, 0.0
    %1043 = vadd.xlane.f32.xlu0 %v1042
    %v1044 = vpop.xlane.xlu0 %1043
    %v1045 = vrot.slane %v1044, 4
    %v1046 = vadd.f32 %v1044, %v1045
    %v1047 = vrot.slane %v1046, 2
    %v1048 = vadd.f32 %v1046, %v1047
    %v1049 = vrot.slane %v1048, 1
    %v1050 = vadd.f32 %v1048, %v1049
    %s1051 = vtos %v1050
    %v1052 = vrcp.pop 8.0
    %v1053 = vmul.f32 8.0, %v1052
    %v1054 = vsub.f32 1.0, %v1053
    %v1055 = vmul.f32 %v1052, %v1054
    %v1056 = vadd.f32 %v1052, %v1055
    %vm1057 = vweird.f32 %v1052
    %v1058 = vsel %vm1057, %v1052, %v1056
    %s1059 = vtos %v1058
    %s1060 = smul.f32 %s1051, %s1059
    %s1061 = ssub.f32 2.0, %s1060
    %s1062 = scalar_lea.smem [#allocation2], 0
    %1063 = sst [smem:[%s1062]] %s1061
    // Predicated region
    $region98: #{_byol_forward.1} parent=1 // pred_check
      _
    $region99: #{_byol_forward.1} parent=1 // pred_check_branch
      %1065 = sbr.rel (0) target = $region101
    $region100: #{_byol_forward.1} parent=1 // pred_region
      %1067 = vsyncadd [#allocation3], 0
      %s1069 = sshll.u32 %s49, 4
      %s1070 = int_to_ptr.hbm [resolvable:$true] %s1069
      %1072 = dma.smem_to_hbm [#allocation2], 16, %s1070, [#allocation3]
    $region101: #{_byol_forward.1} parent=1 // pred_fallthru
      _
    // Predicated region
    $region102: #{_byol_forward.1} parent=1 // pred_check
      _
    $region103: #{_byol_forward.1} parent=1 // pred_check_branch
      %1074 = sbr.rel (0) target = $region105
    $region104: #{_byol_forward.1} parent=1 // pred_region
      _
    $region105: #{_byol_forward.1} parent=1 // pred_fallthru
      _
    // Predicated region
    $region106: #{_byol_forward.1} parent=1 // pred_check
      _
    $region107: #{_byol_forward.1} parent=1 // pred_check_branch
      %1076 = sbr.rel (0) target = $region109
    $region108: #{_byol_forward.1} parent=1 // pred_region
      _
    $region109: #{_byol_forward.1} parent=1 // pred_fallthru
      _
    // Predicated region
    $region110: #{_byol_forward.1} parent=1 // pred_check
      _
    $region111: #{_byol_forward.1} parent=1 // pred_check_branch
      %1078 = sbr.rel (0) target = $region113
    $region112: #{_byol_forward.1} parent=1 // pred_region
      _
    $region113: #{_byol_forward.1} parent=1 // pred_fallthru
      _
    // Predicated region
    $region114: #{_byol_forward.1} parent=1 // pred_check
      _
    $region115: #{_byol_forward.1} parent=1 // pred_check_branch
      %1080 = sbr.rel (0) target = $region117
    $region116: #{_byol_forward.1} parent=1 // pred_region
      _
    $region117: #{_byol_forward.1} parent=1 // pred_fallthru
      _
    // Predicated region
    $region118: #{_byol_forward.1} parent=1 // pred_check
      _
    $region119: #{_byol_forward.1} parent=1 // pred_check_branch
      %1082 = sbr.rel (0) target = $region121
    $region120: #{_byol_forward.1} parent=1 // pred_region
      _
    $region121: #{_byol_forward.1} parent=1 // pred_fallthru
      _
    // Predicated region
    $region122: #{_byol_forward.1} parent=1 // pred_check
      _
    $region123: #{_byol_forward.1} parent=1 // pred_check_branch
      %1084 = sbr.rel (0) target = $region125
    $region124: #{_byol_forward.1} parent=1 // pred_region
      _
    $region125: #{_byol_forward.1} parent=1 // pred_fallthru
      _
    // Predicated region
    $region126: #{_byol_forward.1} parent=1 // pred_check
      _
    $region127: #{_byol_forward.1} parent=1 // pred_check_branch
      %1086 = sbr.rel (0) target = $region129
    $region128: #{_byol_forward.1} parent=1 // pred_region
      _
    $region129: #{_byol_forward.1} parent=1 // pred_fallthru
      _
    // Predicated region
    $region130: #{_byol_forward.1} parent=1 // pred_check
      _
    $region131: #{_byol_forward.1} parent=1 // pred_check_branch
      %1088 = sbr.rel (0) target = $region133
    $region132: #{_byol_forward.1} parent=1 // pred_region
      _
    $region133: #{_byol_forward.1} parent=1 // pred_fallthru
      _
    // Predicated region
    $region134: #{_byol_forward.1} parent=1 // pred_check
      _
    $region135: #{_byol_forward.1} parent=1 // pred_check_branch
      %1090 = sbr.rel (0) target = $region137
    $region136: #{_byol_forward.1} parent=1 // pred_region
      %1092 = dma.done [#allocation3], 16
    $region137: #{_byol_forward.1} parent=1 // pred_fallthru
      _
    // Predicated region
    $region138: #{_byol_forward.1} parent=1 // pred_check
      _
    $region139: #{_byol_forward.1} parent=1 // pred_check_branch
      %1094 = sbr.rel (0) target = $region141
    $region140: #{_byol_forward.1} parent=1 // pred_region
      _
    $region141: #{_byol_forward.1} parent=1 // pred_fallthru
      _
    // Predicated region
    $region142: #{_byol_forward.1} parent=1 // pred_check
      _
    $region143: #{_byol_forward.1} parent=1 // pred_check_branch
      %1096 = sbr.rel (0) target = $region145
    $region144: #{_byol_forward.1} parent=1 // pred_region
      _
    $region145: #{_byol_forward.1} parent=1 // pred_fallthru
      _
    // Predicated region
    $region146: #{_byol_forward.1} parent=1 // pred_check
      _
    $region147: #{_byol_forward.1} parent=1 // pred_check_branch
      %1098 = sbr.rel (0) target = $region149
    $region148: #{_byol_forward.1} parent=1 // pred_region
      _
    $region149: #{_byol_forward.1} parent=1 // pred_fallthru
      _
    // Predicated region
    $region150: #{_byol_forward.1} parent=1 // pred_check
      _
    $region151: #{_byol_forward.1} parent=1 // pred_check_branch
      %1100 = sbr.rel (0) target = $region153
    $region152: #{_byol_forward.1} parent=1 // pred_region
      _
    $region153: #{_byol_forward.1} parent=1 // pred_fallthru
      _
    // Predicated region
    $region154: #{_byol_forward.1} parent=1 // pred_check
      _
    $region155: #{_byol_forward.1} parent=1 // pred_check_branch
      %1102 = sbr.rel (0) target = $region157
    $region156: #{_byol_forward.1} parent=1 // pred_region
      _
    $region157: #{_byol_forward.1} parent=1 // pred_fallthru
      _
    // Predicated region
    $region158: #{_byol_forward.1} parent=1 // pred_check
      _
    $region159: #{_byol_forward.1} parent=1 // pred_check_branch
      %1104 = sbr.rel (0) target = $region161
    $region160: #{_byol_forward.1} parent=1 // pred_region
      _
    $region161: #{_byol_forward.1} parent=1 // pred_fallthru
      _
    // Predicated region
    $region162: #{_byol_forward.1} parent=1 // pred_check
      _
    $region163: #{_byol_forward.1} parent=1 // pred_check_branch
      %1106 = sbr.rel (0) target = $region165
    $region164: #{_byol_forward.1} parent=1 // pred_region
      _
    $region165: #{_byol_forward.1} parent=1 // pred_fallthru
      _
    // Predicated region
    $region166: #{_byol_forward.1} parent=1 // pred_check
      _
    $region167: #{_byol_forward.1} parent=1 // pred_check_branch
      %1108 = sbr.rel (0) target = $region169
    $region168: #{_byol_forward.1} parent=1 // pred_region
      _
    $region169: #{_byol_forward.1} parent=1 // pred_fallthru
      _
    %1109 = sfence
    %1110 = vsyncpa [#allocation3], 1

</llo_original>
